<compile_context>
chip_gen: v6e
topology: v6e:2x2x1
jax: 0.10.0
libtpu: 0.0.40
codegen_flags: <defaults>
</compile_context>

<pallas_src>
from functools import partial

import numpy as np
import jax
import jax.numpy as jnp
from jax.experimental import pallas as pl
from jax.experimental.pallas import tpu as pltpu

HEAD_LANES = 128          # actor (goal) + critic (1), zero-padded to 128 lanes
_OFF = (0, 5, 1)          # stride-2 tap offsets after the even/odd permutation


# ----------------------------- fused Pallas kernel ---------------------------

def _managernet_kernel(x_ref, w1_ref, b1_ref, w2_ref, b2_ref, w3_ref, b3_ref,
                       wh_ref, bh_ref, o_ref, h1_ref, h2_ref, *, bt, goal):
    """Whole ManagerNet forward for one batch tile of `bt` samples.

    Row index of every activation is (spatial_row * bt + sample_in_tile):
      x_ref  : (9*bt, 243)  image rows in even/odd order; lanes = (pixel col in
                            even/odd order) x 27 channels
      h1_ref : (4*bt, 128)  rows = conv1 out row; lanes = out col x 32
                            (channels 16..31 of each group are zero padding)
      h2_ref : (3*bt, 128)  rows = conv2 out row; lanes = out col x 32 (+32 pad)
      out    : (bt, 128)    lanes [0, goal) = sigmoid(actor), lane `goal` = critic
    """
    f32 = jnp.float32

    # conv1: Conv2d(27, 16, 3x3, stride 2) + ReLU.  Column taps are folded into
    # the (243, 128) per-row-tap weights, so this is 3 full-lane matmuls on
    # sublane-aligned row slices of the input ref.
    acc1 = jnp.dot(x_ref[_OFF[0] * bt:_OFF[0] * bt + 4 * bt, :], w1_ref[0],
                   preferred_element_type=f32)
    acc1 = acc1 + jnp.dot(x_ref[_OFF[1] * bt:_OFF[1] * bt + 4 * bt, :], w1_ref[1],
                          preferred_element_type=f32)
    acc1 = acc1 + jnp.dot(x_ref[_OFF[2] * bt:_OFF[2] * bt + 4 * bt, :], w1_ref[2],
                          preferred_element_type=f32)
    h1_ref[...] = jnp.maximum(acc1 + b1_ref[...], 0.0)          # (4bt, 128)

    # conv2: Conv2d(16, 32, 2x2) + ReLU.  Column taps folded -> 2 matmuls.
    acc2 = jnp.dot(h1_ref[0 * bt:3 * bt, :], w2_ref[0], preferred_element_type=f32)
    acc2 = acc2 + jnp.dot(h1_ref[1 * bt:4 * bt, :], w2_ref[1],
                          preferred_element_type=f32)
    h2_ref[...] = jnp.maximum(acc2 + b2_ref[...], 0.0)          # (3bt, 128)

    # fc: Linear(288, 256) + ReLU.  PyTorch's NCHW flatten order is folded into
    # w3's row permutation at build time -> 3 row-block matmuls, no transpose.
    acc3 = jnp.dot(h2_ref[0 * bt:1 * bt, :], w3_ref[0], preferred_element_type=f32)
    acc3 = acc3 + jnp.dot(h2_ref[1 * bt:2 * bt, :], w3_ref[1],
                          preferred_element_type=f32)
    acc3 = acc3 + jnp.dot(h2_ref[2 * bt:3 * bt, :], w3_ref[2],
                          preferred_element_type=f32)
    h3 = jnp.maximum(acc3 + b3_ref[...], 0.0)                   # (bt, 256)

    # fused actor/critic heads: one lane-dense (256, 128) matmul; exact sigmoid
    # on the actor lanes only (critic passed through).
    z = jnp.dot(h3, wh_ref[...], preferred_element_type=f32) + bh_ref[...]
    sig = 1.0 / (1.0 + jnp.exp(-z))          # exact sigmoid (no approx recip)
    lane = jax.lax.broadcasted_iota(jnp.int32, z.shape, 1)
    o_ref[...] = jnp.where(lane < goal, sig, z)


# ------------------------------ wrapper ---------------------------------------

def _tile_batch(b, max_tile=256):
    """Pick (#tiles, tile size).  Tile is a multiple of 8, capped at max_tile."""
    nb = max(1, (b + max_tile - 1) // max_tile)
    bt = ((b + nb - 1) // nb + 7) // 8 * 8
    return nb, bt


def manager_forward(x, params, *, goal_length=12, batch_tile=None):
    b = x.shape[0]
    assert x.shape[1:] == (9, 9, 27), x.shape
    if batch_tile is None:
        nb, bt = _tile_batch(b)
    else:
        bt = batch_tile
        assert bt % 8 == 0, "batch_tile must be a multiple of 8"
        nb = (b + bt - 1) // bt
    bp = nb * bt

    x = x.astype(jnp.float32)
    if bp != b:                                    # pad batch to a whole tile
        x = jnp.pad(x, ((0, bp - b), (0, 0), (0, 0), (0, 0)))

    # One cheap gather on the raw input: even/odd permutation of rows and pixel
    # columns (stride-2 conv taps become contiguous, aligned slices in-kernel),
    # then interleave the batch tile into the row dimension.
    perm = jnp.array([0, 2, 4, 6, 8, 1, 3, 5, 7], dtype=jnp.int32)
    xp = jnp.take(jnp.take(x, perm, axis=1), perm, axis=2)
    xp = xp.reshape(nb, bt, 9, 9 * 27).transpose(0, 2, 1, 3).reshape(nb, 9 * bt, 243)

    kernel = partial(_managernet_kernel, bt=bt, goal=goal_length)
    out = pl.pallas_call(
        kernel,
        out_shape=jax.ShapeDtypeStruct((nb, bt, HEAD_LANES), jnp.float32),
        grid=(nb,),
        in_specs=[
            pl.BlockSpec((None, 9 * bt, 243), lambda i: (i, 0, 0)),   # x tile
            pl.BlockSpec((3, 243, 128), lambda i: (0, 0, 0)),         # conv1 taps
            pl.BlockSpec((1, 128), lambda i: (0, 0)),                 # conv1 bias
            pl.BlockSpec((2, 128, 128), lambda i: (0, 0, 0)),         # conv2 taps
            pl.BlockSpec((1, 128), lambda i: (0, 0)),                 # conv2 bias
            pl.BlockSpec((3, 128, 256), lambda i: (0, 0, 0)),         # fc weight
            pl.BlockSpec((1, 256), lambda i: (0, 0)),                 # fc bias
            pl.BlockSpec((256, HEAD_LANES), lambda i: (0, 0)),        # actor|critic weight
            pl.BlockSpec((1, HEAD_LANES), lambda i: (0, 0)),          # head bias
        ],
        out_specs=pl.BlockSpec((None, bt, HEAD_LANES), lambda i: (i, 0, 0)),
        scratch_shapes=[pltpu.VMEM((4 * bt, 128), jnp.float32),       # h1
                        pltpu.VMEM((3 * bt, 128), jnp.float32)],      # h2
        compiler_params=pltpu.CompilerParams(dimension_semantics=("parallel",)),
    )(xp, params["w1"], params["b1"], params["w2"], params["b2"],
      params["w3"], params["b3"], params["wh"], params["bh"])

    out = out.reshape(bp, HEAD_LANES)[:b]
    return out[:, :goal_length], out[:, goal_length:goal_length + 1]


# --------------------------- parameter construction --------------------------

def orthogonal(rng, shape, gain):
    """Mimics torch.nn.init.orthogonal_(w, gain) on a (out, *rest) tensor."""
    rows = shape[0]
    cols = int(np.prod(shape[1:]))
    a = rng.standard_normal((rows, cols)).astype(np.float64)
    flat_t = rows < cols
    if flat_t:
        a = a.T
    q, r = np.linalg.qr(a)
    q = q * np.sign(np.diag(r))
    if flat_t:
        q = q.T
    return (gain * q).reshape(shape).astype(np.float32)


def make_params(goal_length=12, seed=0):
    assert goal_length + 1 <= HEAD_LANES
    rng = np.random.default_rng(seed)
    w1_t = orthogonal(rng, (16, 27, 3, 3), np.sqrt(2))     # torch OIHW
    w2_t = orthogonal(rng, (32, 16, 2, 2), np.sqrt(2))
    w3_t = orthogonal(rng, (256, 32 * 3 * 3), np.sqrt(2))  # torch (out, in)
    wa_t = orthogonal(rng, (goal_length, 256), 0.01)
    wc_t = orthogonal(rng, (1, 256), 1.0)
    b1 = np.zeros(16, np.float32)
    b2 = np.zeros(32, np.float32)
    b3 = np.zeros(256, np.float32)
    ba = np.zeros(goal_length, np.float32)
    bc = np.zeros(1, np.float32)
    torch_params = dict(w1=w1_t, w2=w2_t, w3=w3_t, wa=wa_t, wc=wc_t,
                        b1=b1, b2=b2, b3=b3, ba=ba, bc=bc)

    COFF = (0, 5, 1)   # column positions of stride-2 taps after even/odd perm

    # conv1: fold the 3 column taps into one (243, 128) weight per row tap;
    # output-channel groups padded 16 -> 32 so h1 is lane-dense.
    w1f = np.zeros((3, 243, 128), np.float32)
    for ki in range(3):
        for kj in range(3):
            tap = w1_t[:, :, ki, kj].T                           # (27, 16)
            for ocol in range(4):
                pos = COFF[kj] + ocol
                w1f[ki, pos * 27:(pos + 1) * 27, ocol * 32:ocol * 32 + 16] = tap
    b1f = np.zeros((1, 128), np.float32)
    for ocol in range(4):
        b1f[0, ocol * 32:ocol * 32 + 16] = b1

    # conv2: fold the 2 column taps into one (128, 128) weight per row tap.
    w2f = np.zeros((2, 128, 128), np.float32)
    for ki in range(2):
        for kj in range(2):
            tap = w2_t[:, :, ki, kj].T                           # (16, 32)
            for c2 in range(3):
                w2f[ki, (c2 + kj) * 32:(c2 + kj) * 32 + 16,
                    c2 * 32:(c2 + 1) * 32] = tap
    b2f = np.zeros((1, 128), np.float32)
    for c2 in range(3):
        b2f[0, c2 * 32:(c2 + 1) * 32] = b2

    # fc: fold the PyTorch NCHW flatten (c, h, w) into an (h, w, c)-ordered row
    # permutation of w3, split into 3 per-spatial-row blocks, padded to 128 rows.
    w3p = w3_t.T.reshape(32, 3, 3, 256).transpose(1, 2, 0, 3).reshape(3, 96, 256)
    w3f = np.zeros((3, 128, 256), np.float32)
    w3f[:, :96, :] = w3p

    # fused actor/critic heads, zero-padded to a lane-dense 128-wide matmul.
    wh = np.zeros((256, HEAD_LANES), np.float32)
    wh[:, :goal_length] = wa_t.T
    wh[:, goal_length] = wc_t[0]
    bh = np.zeros((1, HEAD_LANES), np.float32)
    bh[0, :goal_length] = ba
    bh[0, goal_length] = bc[0]

    params = {
        "w1": jnp.asarray(w1f),
        "b1": jnp.asarray(b1f),
        "w2": jnp.asarray(w2f),
        "b2": jnp.asarray(b2f),
        "w3": jnp.asarray(w3f),
        "b3": jnp.asarray(b3[None, :]),
        "wh": jnp.asarray(wh),
        "bh": jnp.asarray(bh),
    }
    return params, torch_params


# --------------------------- pure-JAX reference -------------------------------

def reference(x, tp):
    xn = jnp.transpose(x, (0, 3, 1, 2))  # NHWC -> NCHW (as the torch module does)
    y = jax.lax.conv_general_dilated(xn, jnp.asarray(tp["w1"]), (2, 2), "VALID",
                                     dimension_numbers=("NCHW", "OIHW", "NCHW"))
    y = jnp.maximum(y + jnp.asarray(tp["b1"]).reshape(1, -1, 1, 1), 0.0)
    y = jax.lax.conv_general_dilated(y, jnp.asarray(tp["w2"]), (1, 1), "VALID",
                                     dimension_numbers=("NCHW", "OIHW", "NCHW"))
    y = jnp.maximum(y + jnp.asarray(tp["b2"]).reshape(1, -1, 1, 1), 0.0)
    f = y.reshape(y.shape[0], -1)
    h = jnp.maximum(f @ jnp.asarray(tp["w3"]).T + jnp.asarray(tp["b3"]), 0.0)
    actor = jax.nn.sigmoid(h @ jnp.asarray(tp["wa"]).T + jnp.asarray(tp["ba"]))
    critic = h @ jnp.asarray(tp["wc"]).T + jnp.asarray(tp["bc"])
    return actor, critic


# ------------------------------- main ----------------------------------------

if __name__ == "__main__":
    GOAL = 12
    B = 2
    params, torch_params = make_params(goal_length=GOAL, seed=0)

    # Input implied by the architecture: 9x9 spatial, 27 channels (NHWC).
    x = jax.random.normal(jax.random.PRNGKey(0), (B, 9, 9, 27), dtype=jnp.float32)

    fwd = jax.jit(partial(manager_forward, goal_length=GOAL))
    actor, critic = fwd(x, params)
    actor = jax.block_until_ready(actor)
    critic = jax.block_until_ready(critic)

    assert actor.shape == (B, GOAL) and critic.shape == (B, 1)

    a_ref, c_ref = reference(x, torch_params)
    np.testing.assert_allclose(np.asarray(actor), np.asarray(a_ref), rtol=1e-3, atol=1e-3)
    np.testing.assert_allclose(np.asarray(critic), np.asarray(c_ref), rtol=1e-3, atol=1e-3)

    print("KERNEL_OK")
</pallas_src>

<mosaic_0001>
module attributes {stable_mosaic.version = 11 : i64} {
  func.func @_managernet_kernel(%arg0: i32, %arg1: memref<1x72x243xf32, #tpu.memory_space<vmem>>, %arg2: memref<3x243x128xf32, #tpu.memory_space<vmem>>, %arg3: memref<1x128xf32, #tpu.memory_space<vmem>>, %arg4: memref<2x128x128xf32, #tpu.memory_space<vmem>>, %arg5: memref<1x128xf32, #tpu.memory_space<vmem>>, %arg6: memref<3x128x256xf32, #tpu.memory_space<vmem>>, %arg7: memref<1x256xf32, #tpu.memory_space<vmem>>, %arg8: memref<256x128xf32, #tpu.memory_space<vmem>>, %arg9: memref<1x128xf32, #tpu.memory_space<vmem>>, %arg10: memref<1x8x128xf32, #tpu.memory_space<vmem>>, %arg11: memref<32x128xf32, #tpu.memory_space<vmem>>, %arg12: memref<24x128xf32, #tpu.memory_space<vmem>>) attributes {dimension_semantics = [#tpu.dimension_semantics<parallel>], iteration_bounds = array<i64: 1>, scalar_prefetch = 0 : i64, scratch_operands = 2 : i64, tpu.core_type = #tpu.core_type<tc>, window_params = [{transform_indices = @transform_0, window_bounds = array<i64: 1, 72, 243>}, {pipeline_mode = #tpu.pipeline_mode<synchronous>, transform_indices = @transform_1, window_bounds = array<i64: 3, 243, 128>}, {pipeline_mode = #tpu.pipeline_mode<synchronous>, transform_indices = @transform_2, window_bounds = array<i64: 1, 128>}, {pipeline_mode = #tpu.pipeline_mode<synchronous>, transform_indices = @transform_3, window_bounds = array<i64: 2, 128, 128>}, {pipeline_mode = #tpu.pipeline_mode<synchronous>, transform_indices = @transform_4, window_bounds = array<i64: 1, 128>}, {pipeline_mode = #tpu.pipeline_mode<synchronous>, transform_indices = @transform_5, window_bounds = array<i64: 3, 128, 256>}, {pipeline_mode = #tpu.pipeline_mode<synchronous>, transform_indices = @transform_6, window_bounds = array<i64: 1, 256>}, {pipeline_mode = #tpu.pipeline_mode<synchronous>, transform_indices = @transform_7, window_bounds = array<i64: 256, 128>}, {pipeline_mode = #tpu.pipeline_mode<synchronous>, transform_indices = @transform_8, window_bounds = array<i64: 1, 128>}, {transform_indices = @transform_9, window_bounds = array<i64: 1, 8, 128>}]} {
    %c0 = arith.constant 0 : index
    %c0_0 = arith.constant 0 : index
    %c0_1 = arith.constant 0 : index
    %0 = vector.load %arg1[%c0, %c0_0, %c0_1] : memref<1x72x243xf32, #tpu.memory_space<vmem>>, vector<1x32x243xf32>
    %1 = vector.shape_cast %0 : vector<1x32x243xf32> to vector<32x243xf32>
    %c0_2 = arith.constant 0 : index
    %c0_3 = arith.constant 0 : index
    %c0_4 = arith.constant 0 : index
    %2 = vector.load %arg2[%c0_2, %c0_3, %c0_4] : memref<3x243x128xf32, #tpu.memory_space<vmem>>, vector<1x243x128xf32>
    %3 = vector.shape_cast %2 : vector<1x243x128xf32> to vector<243x128xf32>
    %cst = arith.constant dense<0.000000e+00> : vector<32x128xf32>
    %4 = tpu.matmul %1, %3, %cst {dimension_numbers = #tpu.dot_dimension_numbers<[1], [0], [0], [1], [0, 0, 1, 1], [], []>} : vector<32x243xf32>, vector<243x128xf32>, vector<32x128xf32> -> vector<32x128xf32>
    %c0_5 = arith.constant 0 : index
    %c40 = arith.constant 40 : index
    %c0_6 = arith.constant 0 : index
    %5 = vector.load %arg1[%c0_5, %c40, %c0_6] : memref<1x72x243xf32, #tpu.memory_space<vmem>>, vector<1x32x243xf32>
    %6 = vector.shape_cast %5 : vector<1x32x243xf32> to vector<32x243xf32>
    %c1 = arith.constant 1 : index
    %c0_7 = arith.constant 0 : index
    %c0_8 = arith.constant 0 : index
    %7 = vector.load %arg2[%c1, %c0_7, %c0_8] : memref<3x243x128xf32, #tpu.memory_space<vmem>>, vector<1x243x128xf32>
    %8 = vector.shape_cast %7 : vector<1x243x128xf32> to vector<243x128xf32>
    %cst_9 = arith.constant dense<0.000000e+00> : vector<32x128xf32>
    %9 = tpu.matmul %6, %8, %cst_9 {dimension_numbers = #tpu.dot_dimension_numbers<[1], [0], [0], [1], [0, 0, 1, 1], [], []>} : vector<32x243xf32>, vector<243x128xf32>, vector<32x128xf32> -> vector<32x128xf32>
    %10 = arith.addf %4, %9 : vector<32x128xf32>
    %c0_10 = arith.constant 0 : index
    %c8 = arith.constant 8 : index
    %c0_11 = arith.constant 0 : index
    %11 = vector.load %arg1[%c0_10, %c8, %c0_11] : memref<1x72x243xf32, #tpu.memory_space<vmem>>, vector<1x32x243xf32>
    %12 = vector.shape_cast %11 : vector<1x32x243xf32> to vector<32x243xf32>
    %c2 = arith.constant 2 : index
    %c0_12 = arith.constant 0 : index
    %c0_13 = arith.constant 0 : index
    %13 = vector.load %arg2[%c2, %c0_12, %c0_13] : memref<3x243x128xf32, #tpu.memory_space<vmem>>, vector<1x243x128xf32>
    %14 = vector.shape_cast %13 : vector<1x243x128xf32> to vector<243x128xf32>
    %cst_14 = arith.constant dense<0.000000e+00> : vector<32x128xf32>
    %15 = tpu.matmul %12, %14, %cst_14 {dimension_numbers = #tpu.dot_dimension_numbers<[1], [0], [0], [1], [0, 0, 1, 1], [], []>} : vector<32x243xf32>, vector<243x128xf32>, vector<32x128xf32> -> vector<32x128xf32>
    %16 = arith.addf %10, %15 : vector<32x128xf32>
    %c0_15 = arith.constant 0 : index
    %c0_16 = arith.constant 0 : index
    %17 = vector.load %arg3[%c0_15, %c0_16] : memref<1x128xf32, #tpu.memory_space<vmem>>, vector<1x128xf32>
    %18 = vector.broadcast %17 : vector<1x128xf32> to vector<32x128xf32>
    %19 = arith.addf %16, %18 : vector<32x128xf32>
    %cst_17 = arith.constant 0.000000e+00 : f32
    %20 = vector.broadcast %cst_17 : f32 to vector<32x128xf32>
    %21 = arith.maximumf %19, %20 : vector<32x128xf32>
    %c0_18 = arith.constant 0 : index
    %c0_19 = arith.constant 0 : index
    %22 = vector.load %arg11[%c0_18, %c0_19] : memref<32x128xf32, #tpu.memory_space<vmem>>, vector<32x128xf32>
    tpu.vector_store %arg11[%c0_18, %c0_19], %21 {strides = array<i32>} : memref<32x128xf32, #tpu.memory_space<vmem>>, vector<32x128xf32>,
    %c0_20 = arith.constant 0 : index
    %c0_21 = arith.constant 0 : index
    %23 = vector.load %arg11[%c0_20, %c0_21] : memref<32x128xf32, #tpu.memory_space<vmem>>, vector<24x128xf32>
    %c0_22 = arith.constant 0 : index
    %c0_23 = arith.constant 0 : index
    %c0_24 = arith.constant 0 : index
    %24 = vector.load %arg4[%c0_22, %c0_23, %c0_24] : memref<2x128x128xf32, #tpu.memory_space<vmem>>, vector<1x128x128xf32>
    %25 = vector.shape_cast %24 : vector<1x128x128xf32> to vector<128x128xf32>
    %cst_25 = arith.constant dense<0.000000e+00> : vector<24x128xf32>
    %26 = tpu.matmul %23, %25, %cst_25 {dimension_numbers = #tpu.dot_dimension_numbers<[1], [0], [0], [1], [0, 0, 1, 1], [], []>} : vector<24x128xf32>, vector<128x128xf32>, vector<24x128xf32> -> vector<24x128xf32>
    %c8_26 = arith.constant 8 : index
    %c0_27 = arith.constant 0 : index
    %27 = vector.load %arg11[%c8_26, %c0_27] : memref<32x128xf32, #tpu.memory_space<vmem>>, vector<24x128xf32>
    %c1_28 = arith.constant 1 : index
    %c0_29 = arith.constant 0 : index
    %c0_30 = arith.constant 0 : index
    %28 = vector.load %arg4[%c1_28, %c0_29, %c0_30] : memref<2x128x128xf32, #tpu.memory_space<vmem>>, vector<1x128x128xf32>
    %29 = vector.shape_cast %28 : vector<1x128x128xf32> to vector<128x128xf32>
    %cst_31 = arith.constant dense<0.000000e+00> : vector<24x128xf32>
    %30 = tpu.matmul %27, %29, %cst_31 {dimension_numbers = #tpu.dot_dimension_numbers<[1], [0], [0], [1], [0, 0, 1, 1], [], []>} : vector<24x128xf32>, vector<128x128xf32>, vector<24x128xf32> -> vector<24x128xf32>
    %31 = arith.addf %26, %30 : vector<24x128xf32>
    %c0_32 = arith.constant 0 : index
    %c0_33 = arith.constant 0 : index
    %32 = vector.load %arg5[%c0_32, %c0_33] : memref<1x128xf32, #tpu.memory_space<vmem>>, vector<1x128xf32>
    %33 = vector.broadcast %32 : vector<1x128xf32> to vector<24x128xf32>
    %34 = arith.addf %31, %33 : vector<24x128xf32>
    %cst_34 = arith.constant 0.000000e+00 : f32
    %35 = vector.broadcast %cst_34 : f32 to vector<24x128xf32>
    %36 = arith.maximumf %34, %35 : vector<24x128xf32>
    %c0_35 = arith.constant 0 : index
    %c0_36 = arith.constant 0 : index
    %37 = vector.load %arg12[%c0_35, %c0_36] : memref<24x128xf32, #tpu.memory_space<vmem>>, vector<24x128xf32>
    tpu.vector_store %arg12[%c0_35, %c0_36], %36 {strides = array<i32>} : memref<24x128xf32, #tpu.memory_space<vmem>>, vector<24x128xf32>,
    %c0_37 = arith.constant 0 : index
    %c0_38 = arith.constant 0 : index
    %38 = vector.load %arg12[%c0_37, %c0_38] : memref<24x128xf32, #tpu.memory_space<vmem>>, vector<8x128xf32>
    %c0_39 = arith.constant 0 : index
    %c0_40 = arith.constant 0 : index
    %c0_41 = arith.constant 0 : index
    %39 = vector.load %arg6[%c0_39, %c0_40, %c0_41] : memref<3x128x256xf32, #tpu.memory_space<vmem>>, vector<1x128x256xf32>
    %40 = vector.shape_cast %39 : vector<1x128x256xf32> to vector<128x256xf32>
    %cst_42 = arith.constant dense<0.000000e+00> : vector<8x256xf32>
    %41 = tpu.matmul %38, %40, %cst_42 {dimension_numbers = #tpu.dot_dimension_numbers<[1], [0], [0], [1], [0, 0, 1, 1], [], []>} : vector<8x128xf32>, vector<128x256xf32>, vector<8x256xf32> -> vector<8x256xf32>
    %c8_43 = arith.constant 8 : index
    %c0_44 = arith.constant 0 : index
    %42 = vector.load %arg12[%c8_43, %c0_44] : memref<24x128xf32, #tpu.memory_space<vmem>>, vector<8x128xf32>
    %c1_45 = arith.constant 1 : index
    %c0_46 = arith.constant 0 : index
    %c0_47 = arith.constant 0 : index
    %43 = vector.load %arg6[%c1_45, %c0_46, %c0_47] : memref<3x128x256xf32, #tpu.memory_space<vmem>>, vector<1x128x256xf32>
    %44 = vector.shape_cast %43 : vector<1x128x256xf32> to vector<128x256xf32>
    %cst_48 = arith.constant dense<0.000000e+00> : vector<8x256xf32>
    %45 = tpu.matmul %42, %44, %cst_48 {dimension_numbers = #tpu.dot_dimension_numbers<[1], [0], [0], [1], [0, 0, 1, 1], [], []>} : vector<8x128xf32>, vector<128x256xf32>, vector<8x256xf32> -> vector<8x256xf32>
    %46 = arith.addf %41, %45 : vector<8x256xf32>
    %c16 = arith.constant 16 : index
    %c0_49 = arith.constant 0 : index
    %47 = vector.load %arg12[%c16, %c0_49] : memref<24x128xf32, #tpu.memory_space<vmem>>, vector<8x128xf32>
    %c2_50 = arith.constant 2 : index
    %c0_51 = arith.constant 0 : index
    %c0_52 = arith.constant 0 : index
    %48 = vector.load %arg6[%c2_50, %c0_51, %c0_52] : memref<3x128x256xf32, #tpu.memory_space<vmem>>, vector<1x128x256xf32>
    %49 = vector.shape_cast %48 : vector<1x128x256xf32> to vector<128x256xf32>
    %cst_53 = arith.constant dense<0.000000e+00> : vector<8x256xf32>
    %50 = tpu.matmul %47, %49, %cst_53 {dimension_numbers = #tpu.dot_dimension_numbers<[1], [0], [0], [1], [0, 0, 1, 1], [], []>} : vector<8x128xf32>, vector<128x256xf32>, vector<8x256xf32> -> vector<8x256xf32>
    %51 = arith.addf %46, %50 : vector<8x256xf32>
    %c0_54 = arith.constant 0 : index
    %c0_55 = arith.constant 0 : index
    %52 = vector.load %arg7[%c0_54, %c0_55] : memref<1x256xf32, #tpu.memory_space<vmem>>, vector<1x256xf32>
    %53 = vector.broadcast %52 : vector<1x256xf32> to vector<8x256xf32>
    %54 = arith.addf %51, %53 : vector<8x256xf32>
    %cst_56 = arith.constant 0.000000e+00 : f32
    %55 = vector.broadcast %cst_56 : f32 to vector<8x256xf32>
    %56 = arith.maximumf %54, %55 : vector<8x256xf32>
    %c0_57 = arith.constant 0 : index
    %c0_58 = arith.constant 0 : index
    %57 = vector.load %arg8[%c0_57, %c0_58] : memref<256x128xf32, #tpu.memory_space<vmem>>, vector<256x128xf32>
    %cst_59 = arith.constant dense<0.000000e+00> : vector<8x128xf32>
    %58 = tpu.matmul %56, %57, %cst_59 {dimension_numbers = #tpu.dot_dimension_numbers<[1], [0], [0], [1], [0, 0, 1, 1], [], []>} : vector<8x256xf32>, vector<256x128xf32>, vector<8x128xf32> -> vector<8x128xf32>
    %c0_60 = arith.constant 0 : index
    %c0_61 = arith.constant 0 : index
    %59 = vector.load %arg9[%c0_60, %c0_61] : memref<1x128xf32, #tpu.memory_space<vmem>>, vector<1x128xf32>
    %60 = vector.broadcast %59 : vector<1x128xf32> to vector<8x128xf32>
    %61 = arith.addf %58, %60 : vector<8x128xf32>
    %cst_62 = arith.constant 0.000000e+00 : f32
    %62 = vector.broadcast %cst_62 : f32 to vector<8x128xf32>
    %63 = arith.subf %62, %61 : vector<8x128xf32>
    %64 = math.exp %63 : vector<8x128xf32>
    %cst_63 = arith.constant 1.000000e+00 : f32
    %65 = vector.broadcast %cst_63 : f32 to vector<8x128xf32>
    %66 = arith.addf %65, %64 : vector<8x128xf32>
    %cst_64 = arith.constant 1.000000e+00 : f32
    %67 = vector.broadcast %cst_64 : f32 to vector<8x128xf32>
    %68 = arith.divf %67, %66 : vector<8x128xf32>
    %69 = tpu.iota {dimensions = array<i32: 1>} : vector<8x128xi32>
    %c12_i32 = arith.constant 12 : i32
    %70 = vector.broadcast %c12_i32 : i32 to vector<8x128xi32>
    %71 = arith.cmpi slt, %69, %70 : vector<8x128xi32>
    %72 = arith.select %71, %68, %61 : vector<8x128xi1>, vector<8x128xf32>
    %c0_65 = arith.constant 0 : index
    %c0_66 = arith.constant 0 : index
    %c0_67 = arith.constant 0 : index
    %73 = vector.load %arg10[%c0_65, %c0_66, %c0_67] : memref<1x8x128xf32, #tpu.memory_space<vmem>>, vector<1x8x128xf32>
    %74 = vector.shape_cast %73 : vector<1x8x128xf32> to vector<8x128xf32>
    %75 = vector.shape_cast %72 : vector<8x128xf32> to vector<1x8x128xf32>
    tpu.vector_store %arg10[%c0_65, %c0_66, %c0_67], %75 {strides = array<i32>} : memref<1x8x128xf32, #tpu.memory_space<vmem>>, vector<1x8x128xf32>,
    return
  }
  func.func @transform_0(%arg0: i32) -> (i32, i32, i32) {
    %c0_i32 = arith.constant 0 : i32
    %c0_i32_0 = arith.constant 0 : i32
    %c0_i32_1 = arith.constant 0 : i32
    return %arg0, %c0_i32, %c0_i32_0 : i32, i32, i32
  }
  func.func @transform_1(%arg0: i32) -> (i32, i32, i32) {
    %c0_i32 = arith.constant 0 : i32
    %c0_i32_0 = arith.constant 0 : i32
    %c0_i32_1 = arith.constant 0 : i32
    %c0_i32_2 = arith.constant 0 : i32
    return %c0_i32, %c0_i32_0, %c0_i32_1 : i32, i32, i32
  }
  func.func @transform_2(%arg0: i32) -> (i32, i32) {
    %c0_i32 = arith.constant 0 : i32
    %c0_i32_0 = arith.constant 0 : i32
    %c0_i32_1 = arith.constant 0 : i32
    return %c0_i32, %c0_i32_0 : i32, i32
  }
  func.func @transform_3(%arg0: i32) -> (i32, i32, i32) {
    %c0_i32 = arith.constant 0 : i32
    %c0_i32_0 = arith.constant 0 : i32
    %c0_i32_1 = arith.constant 0 : i32
    %c0_i32_2 = arith.constant 0 : i32
    return %c0_i32, %c0_i32_0, %c0_i32_1 : i32, i32, i32
  }
  func.func @transform_4(%arg0: i32) -> (i32, i32) {
    %c0_i32 = arith.constant 0 : i32
    %c0_i32_0 = arith.constant 0 : i32
    %c0_i32_1 = arith.constant 0 : i32
    return %c0_i32, %c0_i32_0 : i32, i32
  }
  func.func @transform_5(%arg0: i32) -> (i32, i32, i32) {
    %c0_i32 = arith.constant 0 : i32
    %c0_i32_0 = arith.constant 0 : i32
    %c0_i32_1 = arith.constant 0 : i32
    %c0_i32_2 = arith.constant 0 : i32
    return %c0_i32, %c0_i32_0, %c0_i32_1 : i32, i32, i32
  }
  func.func @transform_6(%arg0: i32) -> (i32, i32) {
    %c0_i32 = arith.constant 0 : i32
    %c0_i32_0 = arith.constant 0 : i32
    %c0_i32_1 = arith.constant 0 : i32
    return %c0_i32, %c0_i32_0 : i32, i32
  }
  func.func @transform_7(%arg0: i32) -> (i32, i32) {
    %c0_i32 = arith.constant 0 : i32
    %c0_i32_0 = arith.constant 0 : i32
    %c0_i32_1 = arith.constant 0 : i32
    return %c0_i32, %c0_i32_0 : i32, i32
  }
  func.func @transform_8(%arg0: i32) -> (i32, i32) {
    %c0_i32 = arith.constant 0 : i32
    %c0_i32_0 = arith.constant 0 : i32
    %c0_i32_1 = arith.constant 0 : i32
    return %c0_i32, %c0_i32_0 : i32, i32
  }
  func.func @transform_9(%arg0: i32) -> (i32, i32, i32) {
    %c0_i32 = arith.constant 0 : i32
    %c0_i32_0 = arith.constant 0 : i32
    %c0_i32_1 = arith.constant 0 : i32
    return %arg0, %c0_i32, %c0_i32_0 : i32, i32, i32
  }
}

</mosaic_0001>

<llo_original>
// kernel: manager_forward.1
$region0: #{manager_forward.1}
  #allocation0 [shape = 'u32[]', space=smem, size = 0x4, offset = 0x4, fixed_abs, tag = 'smem constant byte address 0x4 - core index']
  #allocation1 [shape = 'u32[144,128]{1,0:T(1,128)}', space=vmem, size = 0x12000, scoped, tag = 'internal scratch']
  #allocation2 [shape = 'f32[32,128]{1,0:T(8,128)}', space=vmem, size = 0x4000, scoped, tag = 'scratch operand']
  #allocation3 [shape = 'f32[24,128]{1,0:T(8,128)}', space=vmem, size = 0x3000, scoped, tag = 'scratch operand']
  %s0 = inlined_call_operand.vmem [shape: f32[1,72,243], index: 0, kind: input, shape index: {}]
  %s1 = inlined_call_operand.vmem [shape: f32[3,243,128], index: 1, kind: input, shape index: {}]
  %s2 = inlined_call_operand.vmem [shape: f32[1,128], index: 2, kind: input, shape index: {}]
  %s3 = inlined_call_operand.vmem [shape: f32[2,128,128], index: 3, kind: input, shape index: {}]
  %s4 = inlined_call_operand.vmem [shape: f32[1,128], index: 4, kind: input, shape index: {}]
  %s5 = inlined_call_operand.vmem [shape: f32[3,128,256], index: 5, kind: input, shape index: {}]
  %s6 = inlined_call_operand.vmem [shape: f32[1,256], index: 6, kind: input, shape index: {}]
  %s7 = inlined_call_operand.vmem [shape: f32[256,128], index: 7, kind: input, shape index: {}]
  %s8 = inlined_call_operand.vmem [shape: f32[1,128], index: 8, kind: input, shape index: {}]
  %s9 = inlined_call_operand.vmem [shape: f32[1,8,128], index: 9, kind: output, shape index: {}]
  %s10 = sld [smem:[#allocation0]]
  $region46: #{manager_forward.1} parent=0
    _
  %s12 = ssub.s32 1, %s10
  %s13 = scalar_select 0, %s12, %s10
  // Predicated region
  $region2: #{manager_forward.1} parent=0 // pred_check
    _
  $region3: #{manager_forward.1} parent=0 // pred_check_branch
    %15 = sbr.rel (0) target = $region5
  $region4: #{manager_forward.1} parent=0 // pred_region
    _
  $region5: #{manager_forward.1} parent=0 // pred_fallthru
    _
  // Predicated region
  $region6: #{manager_forward.1} parent=0 // pred_check
    _
  $region7: #{manager_forward.1} parent=0 // pred_check_branch
    %17 = sbr.rel (0) target = $region9
  $region8: #{manager_forward.1} parent=0 // pred_region
    _
  $region9: #{manager_forward.1} parent=0 // pred_fallthru
    _
  // Predicated region
  $region10: #{manager_forward.1} parent=0 // pred_check
    _
  $region11: #{manager_forward.1} parent=0 // pred_check_branch
    %19 = sbr.rel (0) target = $region13
  $region12: #{manager_forward.1} parent=0 // pred_region
    _
  $region13: #{manager_forward.1} parent=0 // pred_fallthru
    _
  // Predicated region
  $region14: #{manager_forward.1} parent=0 // pred_check
    _
  $region15: #{manager_forward.1} parent=0 // pred_check_branch
    %21 = sbr.rel (0) target = $region17
  $region16: #{manager_forward.1} parent=0 // pred_region
    _
  $region17: #{manager_forward.1} parent=0 // pred_fallthru
    _
  // Predicated region
  $region18: #{manager_forward.1} parent=0 // pred_check
    _
  $region19: #{manager_forward.1} parent=0 // pred_check_branch
    %23 = sbr.rel (0) target = $region21
  $region20: #{manager_forward.1} parent=0 // pred_region
    _
  $region21: #{manager_forward.1} parent=0 // pred_fallthru
    _
  // Predicated region
  $region22: #{manager_forward.1} parent=0 // pred_check
    _
  $region23: #{manager_forward.1} parent=0 // pred_check_branch
    %25 = sbr.rel (0) target = $region25
  $region24: #{manager_forward.1} parent=0 // pred_region
    _
  $region25: #{manager_forward.1} parent=0 // pred_fallthru
    _
  // Predicated region
  $region26: #{manager_forward.1} parent=0 // pred_check
    _
  $region27: #{manager_forward.1} parent=0 // pred_check_branch
    %27 = sbr.rel (0) target = $region29
  $region28: #{manager_forward.1} parent=0 // pred_region
    _
  $region29: #{manager_forward.1} parent=0 // pred_fallthru
    _
  // Predicated region
  $region30: #{manager_forward.1} parent=0 // pred_check
    _
  $region31: #{manager_forward.1} parent=0 // pred_check_branch
    %29 = sbr.rel (0) target = $region33
  $region32: #{manager_forward.1} parent=0 // pred_region
    _
  $region33: #{manager_forward.1} parent=0 // pred_fallthru
    _
  // Predicated region
  $region34: #{manager_forward.1} parent=0 // pred_check
    _
  $region35: #{manager_forward.1} parent=0 // pred_check_branch
    %31 = sbr.rel (0) target = $region37
  $region36: #{manager_forward.1} parent=0 // pred_region
    _
  $region37: #{manager_forward.1} parent=0 // pred_fallthru
    _
  %v32 = vld [vmem:[%s0] sm:$0xff]
  %v33 = vld [vmem:[%s0 + $0x8] sm:$0xff]
  %v34 = vld [vmem:[%s0 + $0x10] sm:$0xff]
  %v35 = vld [vmem:[%s0 + $0x18] sm:$0xff]
  %v36 = vld [vmem:[%s0 + $0x20] sm:$0xff]
  %v37 = vld [vmem:[%s0 + $0x28] sm:$0xff]
  %v38 = vld [vmem:[%s0 + $0x30] sm:$0xff]
  %v39 = vld [vmem:[%s0 + $0x38] sm:$0xff]
  %v40 = vld [vmem:[%s1] sm:$0xff]
  %v41 = vld [vmem:[%s1 + $0x8] sm:$0xff]
  %v42 = vld [vmem:[%s1 + $0x10] sm:$0xff]
  %v43 = vld [vmem:[%s1 + $0x18] sm:$0xff]
  %v44 = vld [vmem:[%s1 + $0x20] sm:$0xff]
  %v45 = vld [vmem:[%s1 + $0x28] sm:$0xff]
  %v46 = vld [vmem:[%s1 + $0x30] sm:$0xff]
  %v47 = vld [vmem:[%s1 + $0x38] sm:$0xff]
  %v48 = vld [vmem:[%s1 + $0x40] sm:$0xff]
  %v49 = vld [vmem:[%s1 + $0x48] sm:$0xff]
  %v50 = vld [vmem:[%s1 + $0x50] sm:$0xff]
  %v51 = vld [vmem:[%s1 + $0x58] sm:$0xff]
  %v52 = vld [vmem:[%s1 + $0x60] sm:$0xff]
  %v53 = vld [vmem:[%s1 + $0x68] sm:$0xff]
  %v54 = vld [vmem:[%s1 + $0x70] sm:$0xff]
  %v55 = vld [vmem:[%s1 + $0x78] sm:$0xff]
  %v56 = vld [vmem:[%s1 + $0x80] sm:$0xff]
  %v57 = vld [vmem:[%s1 + $0x88] sm:$0xff]
  %v58 = vld [vmem:[%s1 + $0x90] sm:$0xff]
  %v59 = vld [vmem:[%s1 + $0x98] sm:$0xff]
  %v60 = vld [vmem:[%s1 + $0xa0] sm:$0xff]
  %v61 = vld [vmem:[%s1 + $0xa8] sm:$0xff]
  %v62 = vld [vmem:[%s1 + $0xb0] sm:$0xff]
  %v63 = vld [vmem:[%s1 + $0xb8] sm:$0xff]
  %v64 = vld [vmem:[%s1 + $0xc0] sm:$0xff]
  %v65 = vld [vmem:[%s1 + $0xc8] sm:$0xff]
  %v66 = vld [vmem:[%s1 + $0xd0] sm:$0xff]
  %v67 = vld [vmem:[%s1 + $0xd8] sm:$0xff]
  %v68 = vld [vmem:[%s1 + $0xe0] sm:$0xff]
  %v69 = vld [vmem:[%s1 + $0xe8] sm:$0xff]
  %v70 = vld [vmem:[%s1 + $0xf0] sm:$0x7]
  %v71 = vld [vmem:[%s0 + $0x50] sm:$0xff]
  %v72 = vld [vmem:[%s0 + $0x58] sm:$0xff]
  %v73 = vld [vmem:[%s0 + $0x60] sm:$0xff]
  %v74 = vld [vmem:[%s0 + $0x68] sm:$0xff]
  %v75 = vld [vmem:[%s0 + $0x70] sm:$0xff]
  %v76 = vld [vmem:[%s0 + $0x78] sm:$0xff]
  %v77 = vld [vmem:[%s0 + $0x80] sm:$0xff]
  %v78 = vld [vmem:[%s0 + $0x88] sm:$0xff]
  %s79 = scalar_lea.vmem %s1, 248
  %v80 = vld [vmem:[%s79] sm:$0xff]
  %v81 = vld [vmem:[%s79 + $0x8] sm:$0xff]
  %v82 = vld [vmem:[%s79 + $0x10] sm:$0xff]
  %v83 = vld [vmem:[%s79 + $0x18] sm:$0xff]
  %v84 = vld [vmem:[%s79 + $0x20] sm:$0xff]
  %v85 = vld [vmem:[%s79 + $0x28] sm:$0xff]
  %v86 = vld [vmem:[%s79 + $0x30] sm:$0xff]
  %v87 = vld [vmem:[%s79 + $0x38] sm:$0xff]
  %v88 = vld [vmem:[%s79 + $0x40] sm:$0xff]
  %v89 = vld [vmem:[%s79 + $0x48] sm:$0xff]
  %v90 = vld [vmem:[%s79 + $0x50] sm:$0xff]
  %v91 = vld [vmem:[%s79 + $0x58] sm:$0xff]
  %v92 = vld [vmem:[%s79 + $0x60] sm:$0xff]
  %v93 = vld [vmem:[%s79 + $0x68] sm:$0xff]
  %v94 = vld [vmem:[%s79 + $0x70] sm:$0xff]
  %v95 = vld [vmem:[%s79 + $0x78] sm:$0xff]
  %v96 = vld [vmem:[%s79 + $0x80] sm:$0xff]
  %v97 = vld [vmem:[%s79 + $0x88] sm:$0xff]
  %v98 = vld [vmem:[%s79 + $0x90] sm:$0xff]
  %v99 = vld [vmem:[%s79 + $0x98] sm:$0xff]
  %v100 = vld [vmem:[%s79 + $0xa0] sm:$0xff]
  %v101 = vld [vmem:[%s79 + $0xa8] sm:$0xff]
  %v102 = vld [vmem:[%s79 + $0xb0] sm:$0xff]
  %v103 = vld [vmem:[%s79 + $0xb8] sm:$0xff]
  %v104 = vld [vmem:[%s79 + $0xc0] sm:$0xff]
  %v105 = vld [vmem:[%s79 + $0xc8] sm:$0xff]
  %v106 = vld [vmem:[%s79 + $0xd0] sm:$0xff]
  %v107 = vld [vmem:[%s79 + $0xd8] sm:$0xff]
  %v108 = vld [vmem:[%s79 + $0xe0] sm:$0xff]
  %v109 = vld [vmem:[%s79 + $0xe8] sm:$0xff]
  %v110 = vld [vmem:[%s79 + $0xf0] sm:$0x7]
  %vm111 = vcmask 941056
  %v113 = vsel %vm111, %v72, 0
  %v116 = vsel %vm111, %v74, 0
  %v119 = vsel %vm111, %v76, 0
  %v122 = vsel %vm111, %v78, 0
  %vm124 = vcmask 1042432
  %v126 = vsel %vm124, %v110, 0
  %128 = vmatprep.subr.mxu0 0.0
  %129 = vmatpush1.msra.mxu0 %v95
  %130 = vmatprep.subr.mxu0 0.0
  %131 = vmatpush1.msra.mxu0 %v94
  %132 = vmatprep.subr.mxu0 0.0
  %133 = vmatpush1.msra.mxu0 %v93
  %134 = vmatprep.subr.mxu0 0.0
  %135 = vmatpush1.msra.mxu0 %v92
  %136 = vmatprep.subr.mxu0 0.0
  %137 = vmatpush1.msra.mxu0 %v91
  %138 = vmatprep.subr.mxu0 0.0
  %139 = vmatpush1.msra.mxu0 %v90
  %140 = vmatprep.subr.mxu0 0.0
  %141 = vmatpush1.msra.mxu0 %v89
  %142 = vmatprep.subr.mxu0 0.0
  %143 = vmatpush1.msra.mxu0 %v88
  %144 = vmatprep.subr.mxu0 0.0
  %145 = vmatpush1.msra.mxu0 %v87
  %146 = vmatprep.subr.mxu0 0.0
  %147 = vmatpush1.msra.mxu0 %v86
  %148 = vmatprep.subr.mxu0 0.0
  %149 = vmatpush1.msra.mxu0 %v85
  %150 = vmatprep.subr.mxu0 0.0
  %151 = vmatpush1.msra.mxu0 %v84
  %152 = vmatprep.subr.mxu0 0.0
  %153 = vmatpush1.msra.mxu0 %v83
  %154 = vmatprep.subr.mxu0 0.0
  %155 = vmatpush1.msra.mxu0 %v82
  %156 = vmatprep.subr.mxu0 0.0
  %157 = vmatpush1.msra.mxu0 %v81
  %158 = vmatprep.subr.mxu0 0.0
  %159 = vmatpush1.msra.mxu0 %v80
  %160 = vmatprep.subr.mxu0 0.0
  %161 = vmatpush2.msra.mxu0 0.0
  %162 = vmatprep.subr.mxu0 0.0
  %163 = vmatpush2.msra.mxu0 %v126
  %164 = vmatprep.subr.mxu0 0.0
  %165 = vmatpush2.msra.mxu0 %v109
  %166 = vmatprep.subr.mxu0 0.0
  %167 = vmatpush2.msra.mxu0 %v108
  %168 = vmatprep.subr.mxu0 0.0
  %169 = vmatpush2.msra.mxu0 %v107
  %170 = vmatprep.subr.mxu0 0.0
  %171 = vmatpush2.msra.mxu0 %v106
  %172 = vmatprep.subr.mxu0 0.0
  %173 = vmatpush2.msra.mxu0 %v105
  %174 = vmatprep.subr.mxu0 0.0
  %175 = vmatpush2.msra.mxu0 %v104
  %176 = vmatprep.subr.mxu0 0.0
  %177 = vmatpush2.msra.mxu0 %v103
  %178 = vmatprep.subr.mxu0 0.0
  %179 = vmatpush2.msra.mxu0 %v102
  %180 = vmatprep.subr.mxu0 0.0
  %181 = vmatpush2.msra.mxu0 %v101
  %182 = vmatprep.subr.mxu0 0.0
  %183 = vmatpush2.msra.mxu0 %v100
  %184 = vmatprep.subr.mxu0 0.0
  %185 = vmatpush2.msra.mxu0 %v99
  %186 = vmatprep.subr.mxu0 0.0
  %187 = vmatpush2.msra.mxu0 %v98
  %188 = vmatprep.subr.mxu0 0.0
  %189 = vmatpush2.msra.mxu0 %v97
  %190 = vmatprep.subr.mxu0 0.0
  %191 = vmatpush2.msra.mxu0 %v96
  %192 = vmatprep.mubr.f32.mxu0 %v113
  %193 = vmatmul.mubr.f32.gmra.mxu0 %v71
  %v194 = vpop.f32.mrf.mxu0
  %v195 = vadd.f32 0.0, %v194
  %v196 = vpop.f32.mrf.mxu0
  %197 = vmatprep.mubr.f32.mxu0 %v116
  %198 = vmatmul.mubr.f32.gmra.mxu0 %v73
  %v199 = vpop.f32.mrf.mxu0
  %v200 = vadd.f32 0.0, %v199
  %v201 = vpop.f32.mrf.mxu0
  %202 = vmatprep.mubr.f32.mxu0 %v119
  %203 = vmatmul.mubr.f32.gmra.mxu0 %v75
  %v204 = vpop.f32.mrf.mxu0
  %v205 = vadd.f32 0.0, %v204
  %v206 = vpop.f32.mrf.mxu0
  %207 = vmatprep.mubr.f32.mxu0 %v122
  %208 = vmatmul.mubr.f32.gmra.mxu0 %v77
  %v209 = vpop.f32.mrf.mxu0
  %v210 = vadd.f32 0.0, %v209
  %v211 = vpop.f32.mrf.mxu0
  %212 = vdwg.mxu0
  %v214 = vsel %vm111, %v33, 0
  %v217 = vsel %vm111, %v35, 0
  %v220 = vsel %vm111, %v37, 0
  %v223 = vsel %vm111, %v39, 0
  %v226 = vsel %vm124, %v70, 0
  %228 = vmatprep.subr.mxu0 0.0
  %229 = vmatpush1.msra.mxu0 %v55
  %230 = vmatprep.subr.mxu0 0.0
  %231 = vmatpush1.msra.mxu0 %v54
  %232 = vmatprep.subr.mxu0 0.0
  %233 = vmatpush1.msra.mxu0 %v53
  %234 = vmatprep.subr.mxu0 0.0
  %235 = vmatpush1.msra.mxu0 %v52
  %236 = vmatprep.subr.mxu0 0.0
  %237 = vmatpush1.msra.mxu0 %v51
  %238 = vmatprep.subr.mxu0 0.0
  %239 = vmatpush1.msra.mxu0 %v50
  %240 = vmatprep.subr.mxu0 0.0
  %241 = vmatpush1.msra.mxu0 %v49
  %242 = vmatprep.subr.mxu0 0.0
  %243 = vmatpush1.msra.mxu0 %v48
  %244 = vmatprep.subr.mxu0 0.0
  %245 = vmatpush1.msra.mxu0 %v47
  %246 = vmatprep.subr.mxu0 0.0
  %247 = vmatpush1.msra.mxu0 %v46
  %248 = vmatprep.subr.mxu0 0.0
  %249 = vmatpush1.msra.mxu0 %v45
  %250 = vmatprep.subr.mxu0 0.0
  %251 = vmatpush1.msra.mxu0 %v44
  %252 = vmatprep.subr.mxu0 0.0
  %253 = vmatpush1.msra.mxu0 %v43
  %254 = vmatprep.subr.mxu0 0.0
  %255 = vmatpush1.msra.mxu0 %v42
  %256 = vmatprep.subr.mxu0 0.0
  %257 = vmatpush1.msra.mxu0 %v41
  %258 = vmatprep.subr.mxu0 0.0
  %259 = vmatpush1.msra.mxu0 %v40
  %260 = vmatprep.subr.mxu0 0.0
  %261 = vmatpush2.msra.mxu0 0.0
  %262 = vmatprep.subr.mxu0 0.0
  %263 = vmatpush2.msra.mxu0 %v226
  %264 = vmatprep.subr.mxu0 0.0
  %265 = vmatpush2.msra.mxu0 %v69
  %266 = vmatprep.subr.mxu0 0.0
  %267 = vmatpush2.msra.mxu0 %v68
  %268 = vmatprep.subr.mxu0 0.0
  %269 = vmatpush2.msra.mxu0 %v67
  %270 = vmatprep.subr.mxu0 0.0
  %271 = vmatpush2.msra.mxu0 %v66
  %272 = vmatprep.subr.mxu0 0.0
  %273 = vmatpush2.msra.mxu0 %v65
  %274 = vmatprep.subr.mxu0 0.0
  %275 = vmatpush2.msra.mxu0 %v64
  %276 = vmatprep.subr.mxu0 0.0
  %277 = vmatpush2.msra.mxu0 %v63
  %278 = vmatprep.subr.mxu0 0.0
  %279 = vmatpush2.msra.mxu0 %v62
  %280 = vmatprep.subr.mxu0 0.0
  %281 = vmatpush2.msra.mxu0 %v61
  %282 = vmatprep.subr.mxu0 0.0
  %283 = vmatpush2.msra.mxu0 %v60
  %284 = vmatprep.subr.mxu0 0.0
  %285 = vmatpush2.msra.mxu0 %v59
  %286 = vmatprep.subr.mxu0 0.0
  %287 = vmatpush2.msra.mxu0 %v58
  %288 = vmatprep.subr.mxu0 0.0
  %289 = vmatpush2.msra.mxu0 %v57
  %290 = vmatprep.subr.mxu0 0.0
  %291 = vmatpush2.msra.mxu0 %v56
  %292 = vmatprep.mubr.f32.mxu0 %v214
  %293 = vmatmul.mubr.f32.gmra.mxu0 %v32
  %v294 = vpop.f32.mrf.mxu0
  %v295 = vadd.f32 %v195, %v294
  %v296 = vpop.f32.mrf.mxu0
  %297 = vmatprep.mubr.f32.mxu0 %v217
  %298 = vmatmul.mubr.f32.gmra.mxu0 %v34
  %v299 = vpop.f32.mrf.mxu0
  %v300 = vadd.f32 %v200, %v299
  %v301 = vpop.f32.mrf.mxu0
  %302 = vmatprep.mubr.f32.mxu0 %v220
  %303 = vmatmul.mubr.f32.gmra.mxu0 %v36
  %v304 = vpop.f32.mrf.mxu0
  %v305 = vadd.f32 %v205, %v304
  %v306 = vpop.f32.mrf.mxu0
  %307 = vmatprep.mubr.f32.mxu0 %v223
  %308 = vmatmul.mubr.f32.gmra.mxu0 %v38
  %v309 = vpop.f32.mrf.mxu0
  %v310 = vadd.f32 %v210, %v309
  %v311 = vpop.f32.mrf.mxu0
  %312 = vdwg.mxu0
  %v313 = vld [vmem:[%s0 + $0x10] sm:$0xff]
  %v314 = vld [vmem:[%s0 + $0x18] sm:$0xff]
  %v315 = vld [vmem:[%s0 + $0x20] sm:$0xff]
  %v316 = vld [vmem:[%s0 + $0x28] sm:$0xff]
  %v317 = vld [vmem:[%s0 + $0x30] sm:$0xff]
  %v318 = vld [vmem:[%s0 + $0x38] sm:$0xff]
  %v319 = vld [vmem:[%s0 + $0x40] sm:$0xff]
  %v320 = vld [vmem:[%s0 + $0x48] sm:$0xff]
  %s321 = scalar_lea.vmem %s1, 496
  %v322 = vld [vmem:[%s321] sm:$0xff]
  %v323 = vld [vmem:[%s321 + $0x8] sm:$0xff]
  %v324 = vld [vmem:[%s321 + $0x10] sm:$0xff]
  %v325 = vld [vmem:[%s321 + $0x18] sm:$0xff]
  %v326 = vld [vmem:[%s321 + $0x20] sm:$0xff]
  %v327 = vld [vmem:[%s321 + $0x28] sm:$0xff]
  %v328 = vld [vmem:[%s321 + $0x30] sm:$0xff]
  %v329 = vld [vmem:[%s321 + $0x38] sm:$0xff]
  %v330 = vld [vmem:[%s321 + $0x40] sm:$0xff]
  %v331 = vld [vmem:[%s321 + $0x48] sm:$0xff]
  %v332 = vld [vmem:[%s321 + $0x50] sm:$0xff]
  %v333 = vld [vmem:[%s321 + $0x58] sm:$0xff]
  %v334 = vld [vmem:[%s321 + $0x60] sm:$0xff]
  %v335 = vld [vmem:[%s321 + $0x68] sm:$0xff]
  %v336 = vld [vmem:[%s321 + $0x70] sm:$0xff]
  %v337 = vld [vmem:[%s321 + $0x78] sm:$0xff]
  %v338 = vld [vmem:[%s321 + $0x80] sm:$0xff]
  %v339 = vld [vmem:[%s321 + $0x88] sm:$0xff]
  %v340 = vld [vmem:[%s321 + $0x90] sm:$0xff]
  %v341 = vld [vmem:[%s321 + $0x98] sm:$0xff]
  %v342 = vld [vmem:[%s321 + $0xa0] sm:$0xff]
  %v343 = vld [vmem:[%s321 + $0xa8] sm:$0xff]
  %v344 = vld [vmem:[%s321 + $0xb0] sm:$0xff]
  %v345 = vld [vmem:[%s321 + $0xb8] sm:$0xff]
  %v346 = vld [vmem:[%s321 + $0xc0] sm:$0xff]
  %v347 = vld [vmem:[%s321 + $0xc8] sm:$0xff]
  %v348 = vld [vmem:[%s321 + $0xd0] sm:$0xff]
  %v349 = vld [vmem:[%s321 + $0xd8] sm:$0xff]
  %v350 = vld [vmem:[%s321 + $0xe0] sm:$0xff]
  %v351 = vld [vmem:[%s321 + $0xe8] sm:$0xff]
  %v352 = vld [vmem:[%s321 + $0xf0] sm:$0x7]
  %v354 = vsel %vm111, %v314, 0
  %v357 = vsel %vm111, %v316, 0
  %v360 = vsel %vm111, %v318, 0
  %v363 = vsel %vm111, %v320, 0
  %v366 = vsel %vm124, %v352, 0
  %368 = vmatprep.subr.mxu0 0.0
  %369 = vmatpush1.msra.mxu0 %v337
  %370 = vmatprep.subr.mxu0 0.0
  %371 = vmatpush1.msra.mxu0 %v336
  %372 = vmatprep.subr.mxu0 0.0
  %373 = vmatpush1.msra.mxu0 %v335
  %374 = vmatprep.subr.mxu0 0.0
  %375 = vmatpush1.msra.mxu0 %v334
  %376 = vmatprep.subr.mxu0 0.0
  %377 = vmatpush1.msra.mxu0 %v333
  %378 = vmatprep.subr.mxu0 0.0
  %379 = vmatpush1.msra.mxu0 %v332
  %380 = vmatprep.subr.mxu0 0.0
  %381 = vmatpush1.msra.mxu0 %v331
  %382 = vmatprep.subr.mxu0 0.0
  %383 = vmatpush1.msra.mxu0 %v330
  %384 = vmatprep.subr.mxu0 0.0
  %385 = vmatpush1.msra.mxu0 %v329
  %386 = vmatprep.subr.mxu0 0.0
  %387 = vmatpush1.msra.mxu0 %v328
  %388 = vmatprep.subr.mxu0 0.0
  %389 = vmatpush1.msra.mxu0 %v327
  %390 = vmatprep.subr.mxu0 0.0
  %391 = vmatpush1.msra.mxu0 %v326
  %392 = vmatprep.subr.mxu0 0.0
  %393 = vmatpush1.msra.mxu0 %v325
  %394 = vmatprep.subr.mxu0 0.0
  %395 = vmatpush1.msra.mxu0 %v324
  %396 = vmatprep.subr.mxu0 0.0
  %397 = vmatpush1.msra.mxu0 %v323
  %398 = vmatprep.subr.mxu0 0.0
  %399 = vmatpush1.msra.mxu0 %v322
  %400 = vmatprep.subr.mxu0 0.0
  %401 = vmatpush2.msra.mxu0 0.0
  %402 = vmatprep.subr.mxu0 0.0
  %403 = vmatpush2.msra.mxu0 %v366
  %404 = vmatprep.subr.mxu0 0.0
  %405 = vmatpush2.msra.mxu0 %v351
  %406 = vmatprep.subr.mxu0 0.0
  %407 = vmatpush2.msra.mxu0 %v350
  %408 = vmatprep.subr.mxu0 0.0
  %409 = vmatpush2.msra.mxu0 %v349
  %410 = vmatprep.subr.mxu0 0.0
  %411 = vmatpush2.msra.mxu0 %v348
  %412 = vmatprep.subr.mxu0 0.0
  %413 = vmatpush2.msra.mxu0 %v347
  %414 = vmatprep.subr.mxu0 0.0
  %415 = vmatpush2.msra.mxu0 %v346
  %416 = vmatprep.subr.mxu0 0.0
  %417 = vmatpush2.msra.mxu0 %v345
  %418 = vmatprep.subr.mxu0 0.0
  %419 = vmatpush2.msra.mxu0 %v344
  %420 = vmatprep.subr.mxu0 0.0
  %421 = vmatpush2.msra.mxu0 %v343
  %422 = vmatprep.subr.mxu0 0.0
  %423 = vmatpush2.msra.mxu0 %v342
  %424 = vmatprep.subr.mxu0 0.0
  %425 = vmatpush2.msra.mxu0 %v341
  %426 = vmatprep.subr.mxu0 0.0
  %427 = vmatpush2.msra.mxu0 %v340
  %428 = vmatprep.subr.mxu0 0.0
  %429 = vmatpush2.msra.mxu0 %v339
  %430 = vmatprep.subr.mxu0 0.0
  %431 = vmatpush2.msra.mxu0 %v338
  %432 = vmatprep.mubr.f32.mxu0 %v354
  %433 = vmatmul.mubr.f32.gmra.mxu0 %v313
  %v434 = vpop.f32.mrf.mxu0
  %v435 = vadd.f32 0.0, %v434
  %v436 = vpop.f32.mrf.mxu0
  %437 = vmatprep.mubr.f32.mxu0 %v357
  %438 = vmatmul.mubr.f32.gmra.mxu0 %v315
  %v439 = vpop.f32.mrf.mxu0
  %v440 = vadd.f32 0.0, %v439
  %v441 = vpop.f32.mrf.mxu0
  %442 = vmatprep.mubr.f32.mxu0 %v360
  %443 = vmatmul.mubr.f32.gmra.mxu0 %v317
  %v444 = vpop.f32.mrf.mxu0
  %v445 = vadd.f32 0.0, %v444
  %v446 = vpop.f32.mrf.mxu0
  %447 = vmatprep.mubr.f32.mxu0 %v363
  %448 = vmatmul.mubr.f32.gmra.mxu0 %v319
  %v449 = vpop.f32.mrf.mxu0
  %v450 = vadd.f32 0.0, %v449
  %v451 = vpop.f32.mrf.mxu0
  %452 = vdwg.mxu0
  %v453 = vadd.f32 %v295, %v435
  %v454 = vadd.f32 %v300, %v440
  %v455 = vadd.f32 %v305, %v445
  %v456 = vadd.f32 %v310, %v450
  %v457 = vld [vmem:[%s2] sm:$0x1]
  %v459 = vlaneseq
  %v460 = vshrl.u32 %v459, 7
  %v461 = vsub.s32 0, %v460
  %v462 = vrot.slane %v457, %v461
  %v464 = vadd.f32 %v453, %v462
  %v465 = vadd.f32 %v454, %v462
  %v466 = vadd.f32 %v455, %v462
  %v467 = vadd.f32 %v456, %v462
  %v468 = vmax.f32 %v464, 0.0
  %v469 = vmax.f32 %v465, 0.0
  %v470 = vmax.f32 %v466, 0.0
  %v471 = vmax.f32 %v467, 0.0
  %472 = vst [vmem:[#allocation2] sm:$0xff] %v468
  %473 = vst [vmem:[#allocation2 + $0x8] sm:$0xff] %v469
  %474 = vst [vmem:[#allocation2 + $0x10] sm:$0xff] %v470
  %475 = vst [vmem:[#allocation2 + $0x18] sm:$0xff] %v471
  %v476 = vld [vmem:[#allocation2] sm:$0xff]
  %v477 = vld [vmem:[#allocation2 + $0x8] sm:$0xff]
  %v478 = vld [vmem:[#allocation2 + $0x10] sm:$0xff]
  %v479 = vld [vmem:[%s3] sm:$0xff]
  %v480 = vld [vmem:[%s3 + $0x8] sm:$0xff]
  %v481 = vld [vmem:[%s3 + $0x10] sm:$0xff]
  %v482 = vld [vmem:[%s3 + $0x18] sm:$0xff]
  %v483 = vld [vmem:[%s3 + $0x20] sm:$0xff]
  %v484 = vld [vmem:[%s3 + $0x28] sm:$0xff]
  %v485 = vld [vmem:[%s3 + $0x30] sm:$0xff]
  %v486 = vld [vmem:[%s3 + $0x38] sm:$0xff]
  %v487 = vld [vmem:[%s3 + $0x40] sm:$0xff]
  %v488 = vld [vmem:[%s3 + $0x48] sm:$0xff]
  %v489 = vld [vmem:[%s3 + $0x50] sm:$0xff]
  %v490 = vld [vmem:[%s3 + $0x58] sm:$0xff]
  %v491 = vld [vmem:[%s3 + $0x60] sm:$0xff]
  %v492 = vld [vmem:[%s3 + $0x68] sm:$0xff]
  %v493 = vld [vmem:[%s3 + $0x70] sm:$0xff]
  %v494 = vld [vmem:[%s3 + $0x78] sm:$0xff]
  %v495 = vld [vmem:[#allocation2 + $0x8] sm:$0xff]
  %v496 = vld [vmem:[#allocation2 + $0x10] sm:$0xff]
  %v497 = vld [vmem:[#allocation2 + $0x18] sm:$0xff]
  %s498 = scalar_lea.vmem %s3, 128
  %v499 = vld [vmem:[%s498] sm:$0xff]
  %v500 = vld [vmem:[%s498 + $0x8] sm:$0xff]
  %v501 = vld [vmem:[%s498 + $0x10] sm:$0xff]
  %v502 = vld [vmem:[%s498 + $0x18] sm:$0xff]
  %v503 = vld [vmem:[%s498 + $0x20] sm:$0xff]
  %v504 = vld [vmem:[%s498 + $0x28] sm:$0xff]
  %v505 = vld [vmem:[%s498 + $0x30] sm:$0xff]
  %v506 = vld [vmem:[%s498 + $0x38] sm:$0xff]
  %v507 = vld [vmem:[%s498 + $0x40] sm:$0xff]
  %v508 = vld [vmem:[%s498 + $0x48] sm:$0xff]
  %v509 = vld [vmem:[%s498 + $0x50] sm:$0xff]
  %v510 = vld [vmem:[%s498 + $0x58] sm:$0xff]
  %v511 = vld [vmem:[%s498 + $0x60] sm:$0xff]
  %v512 = vld [vmem:[%s498 + $0x68] sm:$0xff]
  %v513 = vld [vmem:[%s498 + $0x70] sm:$0xff]
  %v514 = vld [vmem:[%s498 + $0x78] sm:$0xff]
  %515 = vmatprep.subr.mxu0 0.0
  %516 = vmatpush1.msra.mxu0 %v514
  %517 = vmatprep.subr.mxu0 0.0
  %518 = vmatpush1.msra.mxu0 %v513
  %519 = vmatprep.subr.mxu0 0.0
  %520 = vmatpush1.msra.mxu0 %v512
  %521 = vmatprep.subr.mxu0 0.0
  %522 = vmatpush1.msra.mxu0 %v511
  %523 = vmatprep.subr.mxu0 0.0
  %524 = vmatpush1.msra.mxu0 %v510
  %525 = vmatprep.subr.mxu0 0.0
  %526 = vmatpush1.msra.mxu0 %v509
  %527 = vmatprep.subr.mxu0 0.0
  %528 = vmatpush1.msra.mxu0 %v508
  %529 = vmatprep.subr.mxu0 0.0
  %530 = vmatpush1.msra.mxu0 %v507
  %531 = vmatprep.subr.mxu0 0.0
  %532 = vmatpush1.msra.mxu0 %v506
  %533 = vmatprep.subr.mxu0 0.0
  %534 = vmatpush1.msra.mxu0 %v505
  %535 = vmatprep.subr.mxu0 0.0
  %536 = vmatpush1.msra.mxu0 %v504
  %537 = vmatprep.subr.mxu0 0.0
  %538 = vmatpush1.msra.mxu0 %v503
  %539 = vmatprep.subr.mxu0 0.0
  %540 = vmatpush1.msra.mxu0 %v502
  %541 = vmatprep.subr.mxu0 0.0
  %542 = vmatpush1.msra.mxu0 %v501
  %543 = vmatprep.subr.mxu0 0.0
  %544 = vmatpush1.msra.mxu0 %v500
  %545 = vmatprep.subr.mxu0 0.0
  %546 = vmatpush1.msra.mxu0 %v499
  %547 = vmatprep.subr.mxu0 0.0
  %548 = vmatpush2.msra.mxu0 0.0
  %549 = vmatprep.subr.mxu0 0.0
  %550 = vmatpush2.msra.mxu0 0.0
  %551 = vmatprep.subr.mxu0 0.0
  %552 = vmatpush2.msra.mxu0 0.0
  %553 = vmatprep.subr.mxu0 0.0
  %554 = vmatpush2.msra.mxu0 0.0
  %555 = vmatprep.subr.mxu0 0.0
  %556 = vmatpush2.msra.mxu0 0.0
  %557 = vmatprep.subr.mxu0 0.0
  %558 = vmatpush2.msra.mxu0 0.0
  %559 = vmatprep.subr.mxu0 0.0
  %560 = vmatpush2.msra.mxu0 0.0
  %561 = vmatprep.subr.mxu0 0.0
  %562 = vmatpush2.msra.mxu0 0.0
  %563 = vmatprep.subr.mxu0 0.0
  %564 = vmatpush2.msra.mxu0 0.0
  %565 = vmatprep.subr.mxu0 0.0
  %566 = vmatpush2.msra.mxu0 0.0
  %567 = vmatprep.subr.mxu0 0.0
  %568 = vmatpush2.msra.mxu0 0.0
  %569 = vmatprep.subr.mxu0 0.0
  %570 = vmatpush2.msra.mxu0 0.0
  %571 = vmatprep.subr.mxu0 0.0
  %572 = vmatpush2.msra.mxu0 0.0
  %573 = vmatprep.subr.mxu0 0.0
  %574 = vmatpush2.msra.mxu0 0.0
  %575 = vmatprep.subr.mxu0 0.0
  %576 = vmatpush2.msra.mxu0 0.0
  %577 = vmatprep.subr.mxu0 0.0
  %578 = vmatpush2.msra.mxu0 0.0
  %579 = vmatprep.mubr.f32.mxu0 0.0
  %580 = vmatmul.mubr.f32.gmra.mxu0 %v495
  %v581 = vpop.f32.mrf.mxu0
  %v582 = vadd.f32 0.0, %v581
  %v583 = vpop.f32.mrf.mxu0
  %584 = vmatprep.mubr.f32.mxu0 0.0
  %585 = vmatmul.mubr.f32.gmra.mxu0 %v496
  %v586 = vpop.f32.mrf.mxu0
  %v587 = vadd.f32 0.0, %v586
  %v588 = vpop.f32.mrf.mxu0
  %589 = vmatprep.mubr.f32.mxu0 0.0
  %590 = vmatmul.mubr.f32.gmra.mxu0 %v497
  %v591 = vpop.f32.mrf.mxu0
  %v592 = vadd.f32 0.0, %v591
  %v593 = vpop.f32.mrf.mxu0
  %594 = vdwg.mxu0
  %595 = vmatprep.subr.mxu0 0.0
  %596 = vmatpush1.msra.mxu0 %v494
  %597 = vmatprep.subr.mxu0 0.0
  %598 = vmatpush1.msra.mxu0 %v493
  %599 = vmatprep.subr.mxu0 0.0
  %600 = vmatpush1.msra.mxu0 %v492
  %601 = vmatprep.subr.mxu0 0.0
  %602 = vmatpush1.msra.mxu0 %v491
  %603 = vmatprep.subr.mxu0 0.0
  %604 = vmatpush1.msra.mxu0 %v490
  %605 = vmatprep.subr.mxu0 0.0
  %606 = vmatpush1.msra.mxu0 %v489
  %607 = vmatprep.subr.mxu0 0.0
  %608 = vmatpush1.msra.mxu0 %v488
  %609 = vmatprep.subr.mxu0 0.0
  %610 = vmatpush1.msra.mxu0 %v487
  %611 = vmatprep.subr.mxu0 0.0
  %612 = vmatpush1.msra.mxu0 %v486
  %613 = vmatprep.subr.mxu0 0.0
  %614 = vmatpush1.msra.mxu0 %v485
  %615 = vmatprep.subr.mxu0 0.0
  %616 = vmatpush1.msra.mxu0 %v484
  %617 = vmatprep.subr.mxu0 0.0
  %618 = vmatpush1.msra.mxu0 %v483
  %619 = vmatprep.subr.mxu0 0.0
  %620 = vmatpush1.msra.mxu0 %v482
  %621 = vmatprep.subr.mxu0 0.0
  %622 = vmatpush1.msra.mxu0 %v481
  %623 = vmatprep.subr.mxu0 0.0
  %624 = vmatpush1.msra.mxu0 %v480
  %625 = vmatprep.subr.mxu0 0.0
  %626 = vmatpush1.msra.mxu0 %v479
  %627 = vmatprep.subr.mxu0 0.0
  %628 = vmatpush2.msra.mxu0 0.0
  %629 = vmatprep.subr.mxu0 0.0
  %630 = vmatpush2.msra.mxu0 0.0
  %631 = vmatprep.subr.mxu0 0.0
  %632 = vmatpush2.msra.mxu0 0.0
  %633 = vmatprep.subr.mxu0 0.0
  %634 = vmatpush2.msra.mxu0 0.0
  %635 = vmatprep.subr.mxu0 0.0
  %636 = vmatpush2.msra.mxu0 0.0
  %637 = vmatprep.subr.mxu0 0.0
  %638 = vmatpush2.msra.mxu0 0.0
  %639 = vmatprep.subr.mxu0 0.0
  %640 = vmatpush2.msra.mxu0 0.0
  %641 = vmatprep.subr.mxu0 0.0
  %642 = vmatpush2.msra.mxu0 0.0
  %643 = vmatprep.subr.mxu0 0.0
  %644 = vmatpush2.msra.mxu0 0.0
  %645 = vmatprep.subr.mxu0 0.0
  %646 = vmatpush2.msra.mxu0 0.0
  %647 = vmatprep.subr.mxu0 0.0
  %648 = vmatpush2.msra.mxu0 0.0
  %649 = vmatprep.subr.mxu0 0.0
  %650 = vmatpush2.msra.mxu0 0.0
  %651 = vmatprep.subr.mxu0 0.0
  %652 = vmatpush2.msra.mxu0 0.0
  %653 = vmatprep.subr.mxu0 0.0
  %654 = vmatpush2.msra.mxu0 0.0
  %655 = vmatprep.subr.mxu0 0.0
  %656 = vmatpush2.msra.mxu0 0.0
  %657 = vmatprep.subr.mxu0 0.0
  %658 = vmatpush2.msra.mxu0 0.0
  %659 = vmatprep.mubr.f32.mxu0 0.0
  %660 = vmatmul.mubr.f32.gmra.mxu0 %v476
  %v661 = vpop.f32.mrf.mxu0
  %v662 = vadd.f32 %v582, %v661
  %v663 = vpop.f32.mrf.mxu0
  %664 = vmatprep.mubr.f32.mxu0 0.0
  %665 = vmatmul.mubr.f32.gmra.mxu0 %v477
  %v666 = vpop.f32.mrf.mxu0
  %v667 = vadd.f32 %v587, %v666
  %v668 = vpop.f32.mrf.mxu0
  %669 = vmatprep.mubr.f32.mxu0 0.0
  %670 = vmatmul.mubr.f32.gmra.mxu0 %v478
  %v671 = vpop.f32.mrf.mxu0
  %v672 = vadd.f32 %v592, %v671
  %v673 = vpop.f32.mrf.mxu0
  %674 = vdwg.mxu0
  %v675 = vld [vmem:[%s4] sm:$0x1]
  %v677 = vlaneseq
  %v678 = vshrl.u32 %v677, 7
  %v679 = vsub.s32 0, %v678
  %v680 = vrot.slane %v675, %v679
  %v682 = vadd.f32 %v662, %v680
  %v683 = vadd.f32 %v667, %v680
  %v684 = vadd.f32 %v672, %v680
  %v685 = vmax.f32 %v682, 0.0
  %v686 = vmax.f32 %v683, 0.0
  %v687 = vmax.f32 %v684, 0.0
  %688 = vst [vmem:[#allocation3] sm:$0xff] %v685
  %689 = vst [vmem:[#allocation3 + $0x8] sm:$0xff] %v686
  %690 = vst [vmem:[#allocation3 + $0x10] sm:$0xff] %v687
  %v691 = vld [vmem:[#allocation3] sm:$0xff]
  %v692 = vld [vmem:[%s5] sm:$0xff]
  %v693 = vld [vmem:[%s5 + $0x8] sm:$0xff]
  %v694 = vld [vmem:[%s5 + $0x10] sm:$0xff]
  %v695 = vld [vmem:[%s5 + $0x18] sm:$0xff]
  %v696 = vld [vmem:[%s5 + $0x20] sm:$0xff]
  %v697 = vld [vmem:[%s5 + $0x28] sm:$0xff]
  %v698 = vld [vmem:[%s5 + $0x30] sm:$0xff]
  %v699 = vld [vmem:[%s5 + $0x38] sm:$0xff]
  %v700 = vld [vmem:[%s5 + $0x40] sm:$0xff]
  %v701 = vld [vmem:[%s5 + $0x48] sm:$0xff]
  %v702 = vld [vmem:[%s5 + $0x50] sm:$0xff]
  %v703 = vld [vmem:[%s5 + $0x58] sm:$0xff]
  %v704 = vld [vmem:[%s5 + $0x60] sm:$0xff]
  %v705 = vld [vmem:[%s5 + $0x68] sm:$0xff]
  %v706 = vld [vmem:[%s5 + $0x70] sm:$0xff]
  %v707 = vld [vmem:[%s5 + $0x78] sm:$0xff]
  %v708 = vld [vmem:[%s5 + $0x80] sm:$0xff]
  %v709 = vld [vmem:[%s5 + $0x88] sm:$0xff]
  %v710 = vld [vmem:[%s5 + $0x90] sm:$0xff]
  %v711 = vld [vmem:[%s5 + $0x98] sm:$0xff]
  %v712 = vld [vmem:[%s5 + $0xa0] sm:$0xff]
  %v713 = vld [vmem:[%s5 + $0xa8] sm:$0xff]
  %v714 = vld [vmem:[%s5 + $0xb0] sm:$0xff]
  %v715 = vld [vmem:[%s5 + $0xb8] sm:$0xff]
  %v716 = vld [vmem:[%s5 + $0xc0] sm:$0xff]
  %v717 = vld [vmem:[%s5 + $0xc8] sm:$0xff]
  %v718 = vld [vmem:[%s5 + $0xd0] sm:$0xff]
  %v719 = vld [vmem:[%s5 + $0xd8] sm:$0xff]
  %v720 = vld [vmem:[%s5 + $0xe0] sm:$0xff]
  %v721 = vld [vmem:[%s5 + $0xe8] sm:$0xff]
  %v722 = vld [vmem:[%s5 + $0xf0] sm:$0xff]
  %v723 = vld [vmem:[%s5 + $0xf8] sm:$0xff]
  %v724 = vld [vmem:[#allocation3 + $0x8] sm:$0xff]
  %s725 = scalar_lea.vmem %s5, 256
  %v726 = vld [vmem:[%s725] sm:$0xff]
  %v727 = vld [vmem:[%s725 + $0x8] sm:$0xff]
  %v728 = vld [vmem:[%s725 + $0x10] sm:$0xff]
  %v729 = vld [vmem:[%s725 + $0x18] sm:$0xff]
  %v730 = vld [vmem:[%s725 + $0x20] sm:$0xff]
  %v731 = vld [vmem:[%s725 + $0x28] sm:$0xff]
  %v732 = vld [vmem:[%s725 + $0x30] sm:$0xff]
  %v733 = vld [vmem:[%s725 + $0x38] sm:$0xff]
  %v734 = vld [vmem:[%s725 + $0x40] sm:$0xff]
  %v735 = vld [vmem:[%s725 + $0x48] sm:$0xff]
  %v736 = vld [vmem:[%s725 + $0x50] sm:$0xff]
  %v737 = vld [vmem:[%s725 + $0x58] sm:$0xff]
  %v738 = vld [vmem:[%s725 + $0x60] sm:$0xff]
  %v739 = vld [vmem:[%s725 + $0x68] sm:$0xff]
  %v740 = vld [vmem:[%s725 + $0x70] sm:$0xff]
  %v741 = vld [vmem:[%s725 + $0x78] sm:$0xff]
  %v742 = vld [vmem:[%s725 + $0x80] sm:$0xff]
  %v743 = vld [vmem:[%s725 + $0x88] sm:$0xff]
  %v744 = vld [vmem:[%s725 + $0x90] sm:$0xff]
  %v745 = vld [vmem:[%s725 + $0x98] sm:$0xff]
  %v746 = vld [vmem:[%s725 + $0xa0] sm:$0xff]
  %v747 = vld [vmem:[%s725 + $0xa8] sm:$0xff]
  %v748 = vld [vmem:[%s725 + $0xb0] sm:$0xff]
  %v749 = vld [vmem:[%s725 + $0xb8] sm:$0xff]
  %v750 = vld [vmem:[%s725 + $0xc0] sm:$0xff]
  %v751 = vld [vmem:[%s725 + $0xc8] sm:$0xff]
  %v752 = vld [vmem:[%s725 + $0xd0] sm:$0xff]
  %v753 = vld [vmem:[%s725 + $0xd8] sm:$0xff]
  %v754 = vld [vmem:[%s725 + $0xe0] sm:$0xff]
  %v755 = vld [vmem:[%s725 + $0xe8] sm:$0xff]
  %v756 = vld [vmem:[%s725 + $0xf0] sm:$0xff]
  %v757 = vld [vmem:[%s725 + $0xf8] sm:$0xff]
  %758 = vmatprep.subr.mxu0 %v757
  %759 = vmatpush1.msra.mxu0 %v756
  %760 = vmatprep.subr.mxu0 %v755
  %761 = vmatpush1.msra.mxu0 %v754
  %762 = vmatprep.subr.mxu0 %v753
  %763 = vmatpush1.msra.mxu0 %v752
  %764 = vmatprep.subr.mxu0 %v751
  %765 = vmatpush1.msra.mxu0 %v750
  %766 = vmatprep.subr.mxu0 %v749
  %767 = vmatpush1.msra.mxu0 %v748
  %768 = vmatprep.subr.mxu0 %v747
  %769 = vmatpush1.msra.mxu0 %v746
  %770 = vmatprep.subr.mxu0 %v745
  %771 = vmatpush1.msra.mxu0 %v744
  %772 = vmatprep.subr.mxu0 %v743
  %773 = vmatpush1.msra.mxu0 %v742
  %774 = vmatprep.subr.mxu0 %v741
  %775 = vmatpush1.msra.mxu0 %v740
  %776 = vmatprep.subr.mxu0 %v739
  %777 = vmatpush1.msra.mxu0 %v738
  %778 = vmatprep.subr.mxu0 %v737
  %779 = vmatpush1.msra.mxu0 %v736
  %780 = vmatprep.subr.mxu0 %v735
  %781 = vmatpush1.msra.mxu0 %v734
  %782 = vmatprep.subr.mxu0 %v733
  %783 = vmatpush1.msra.mxu0 %v732
  %784 = vmatprep.subr.mxu0 %v731
  %785 = vmatpush1.msra.mxu0 %v730
  %786 = vmatprep.subr.mxu0 %v729
  %787 = vmatpush1.msra.mxu0 %v728
  %788 = vmatprep.subr.mxu0 %v727
  %789 = vmatpush1.msra.mxu0 %v726
  %790 = vmatprep.subr.mxu0 0.0
  %791 = vmatpush2.msra.mxu0 0.0
  %792 = vmatprep.subr.mxu0 0.0
  %793 = vmatpush2.msra.mxu0 0.0
  %794 = vmatprep.subr.mxu0 0.0
  %795 = vmatpush2.msra.mxu0 0.0
  %796 = vmatprep.subr.mxu0 0.0
  %797 = vmatpush2.msra.mxu0 0.0
  %798 = vmatprep.subr.mxu0 0.0
  %799 = vmatpush2.msra.mxu0 0.0
  %800 = vmatprep.subr.mxu0 0.0
  %801 = vmatpush2.msra.mxu0 0.0
  %802 = vmatprep.subr.mxu0 0.0
  %803 = vmatpush2.msra.mxu0 0.0
  %804 = vmatprep.subr.mxu0 0.0
  %805 = vmatpush2.msra.mxu0 0.0
  %806 = vmatprep.subr.mxu0 0.0
  %807 = vmatpush2.msra.mxu0 0.0
  %808 = vmatprep.subr.mxu0 0.0
  %809 = vmatpush2.msra.mxu0 0.0
  %810 = vmatprep.subr.mxu0 0.0
  %811 = vmatpush2.msra.mxu0 0.0
  %812 = vmatprep.subr.mxu0 0.0
  %813 = vmatpush2.msra.mxu0 0.0
  %814 = vmatprep.subr.mxu0 0.0
  %815 = vmatpush2.msra.mxu0 0.0
  %816 = vmatprep.subr.mxu0 0.0
  %817 = vmatpush2.msra.mxu0 0.0
  %818 = vmatprep.subr.mxu0 0.0
  %819 = vmatpush2.msra.mxu0 0.0
  %820 = vmatprep.subr.mxu0 0.0
  %821 = vmatpush2.msra.mxu0 0.0
  %822 = vmatprep.mubr.f32.mxu0 0.0
  %823 = vmatmul.mubr.f32.gmra.mxu0 %v724
  %v824 = vpop.f32.mrf.mxu0
  %v825 = vadd.f32 0.0, %v824
  %v826 = vpop.f32.mrf.mxu0
  %v827 = vadd.f32 0.0, %v826
  %828 = vdwg.mxu0
  %829 = vmatprep.subr.mxu0 %v723
  %830 = vmatpush1.msra.mxu0 %v722
  %831 = vmatprep.subr.mxu0 %v721
  %832 = vmatpush1.msra.mxu0 %v720
  %833 = vmatprep.subr.mxu0 %v719
  %834 = vmatpush1.msra.mxu0 %v718
  %835 = vmatprep.subr.mxu0 %v717
  %836 = vmatpush1.msra.mxu0 %v716
  %837 = vmatprep.subr.mxu0 %v715
  %838 = vmatpush1.msra.mxu0 %v714
  %839 = vmatprep.subr.mxu0 %v713
  %840 = vmatpush1.msra.mxu0 %v712
  %841 = vmatprep.subr.mxu0 %v711
  %842 = vmatpush1.msra.mxu0 %v710
  %843 = vmatprep.subr.mxu0 %v709
  %844 = vmatpush1.msra.mxu0 %v708
  %845 = vmatprep.subr.mxu0 %v707
  %846 = vmatpush1.msra.mxu0 %v706
  %847 = vmatprep.subr.mxu0 %v705
  %848 = vmatpush1.msra.mxu0 %v704
  %849 = vmatprep.subr.mxu0 %v703
  %850 = vmatpush1.msra.mxu0 %v702
  %851 = vmatprep.subr.mxu0 %v701
  %852 = vmatpush1.msra.mxu0 %v700
  %853 = vmatprep.subr.mxu0 %v699
  %854 = vmatpush1.msra.mxu0 %v698
  %855 = vmatprep.subr.mxu0 %v697
  %856 = vmatpush1.msra.mxu0 %v696
  %857 = vmatprep.subr.mxu0 %v695
  %858 = vmatpush1.msra.mxu0 %v694
  %859 = vmatprep.subr.mxu0 %v693
  %860 = vmatpush1.msra.mxu0 %v692
  %861 = vmatprep.subr.mxu0 0.0
  %862 = vmatpush2.msra.mxu0 0.0
  %863 = vmatprep.subr.mxu0 0.0
  %864 = vmatpush2.msra.mxu0 0.0
  %865 = vmatprep.subr.mxu0 0.0
  %866 = vmatpush2.msra.mxu0 0.0
  %867 = vmatprep.subr.mxu0 0.0
  %868 = vmatpush2.msra.mxu0 0.0
  %869 = vmatprep.subr.mxu0 0.0
  %870 = vmatpush2.msra.mxu0 0.0
  %871 = vmatprep.subr.mxu0 0.0
  %872 = vmatpush2.msra.mxu0 0.0
  %873 = vmatprep.subr.mxu0 0.0
  %874 = vmatpush2.msra.mxu0 0.0
  %875 = vmatprep.subr.mxu0 0.0
  %876 = vmatpush2.msra.mxu0 0.0
  %877 = vmatprep.subr.mxu0 0.0
  %878 = vmatpush2.msra.mxu0 0.0
  %879 = vmatprep.subr.mxu0 0.0
  %880 = vmatpush2.msra.mxu0 0.0
  %881 = vmatprep.subr.mxu0 0.0
  %882 = vmatpush2.msra.mxu0 0.0
  %883 = vmatprep.subr.mxu0 0.0
  %884 = vmatpush2.msra.mxu0 0.0
  %885 = vmatprep.subr.mxu0 0.0
  %886 = vmatpush2.msra.mxu0 0.0
  %887 = vmatprep.subr.mxu0 0.0
  %888 = vmatpush2.msra.mxu0 0.0
  %889 = vmatprep.subr.mxu0 0.0
  %890 = vmatpush2.msra.mxu0 0.0
  %891 = vmatprep.subr.mxu0 0.0
  %892 = vmatpush2.msra.mxu0 0.0
  %893 = vmatprep.mubr.f32.mxu0 0.0
  %894 = vmatmul.mubr.f32.gmra.mxu0 %v691
  %v895 = vpop.f32.mrf.mxu0
  %v896 = vadd.f32 %v825, %v895
  %v897 = vpop.f32.mrf.mxu0
  %v898 = vadd.f32 %v827, %v897
  %899 = vdwg.mxu0
  %v900 = vld [vmem:[#allocation3 + $0x10] sm:$0xff]
  %s901 = scalar_lea.vmem %s5, 512
  %v902 = vld [vmem:[%s901] sm:$0xff]
  %v903 = vld [vmem:[%s901 + $0x8] sm:$0xff]
  %v904 = vld [vmem:[%s901 + $0x10] sm:$0xff]
  %v905 = vld [vmem:[%s901 + $0x18] sm:$0xff]
  %v906 = vld [vmem:[%s901 + $0x20] sm:$0xff]
  %v907 = vld [vmem:[%s901 + $0x28] sm:$0xff]
  %v908 = vld [vmem:[%s901 + $0x30] sm:$0xff]
  %v909 = vld [vmem:[%s901 + $0x38] sm:$0xff]
  %v910 = vld [vmem:[%s901 + $0x40] sm:$0xff]
  %v911 = vld [vmem:[%s901 + $0x48] sm:$0xff]
  %v912 = vld [vmem:[%s901 + $0x50] sm:$0xff]
  %v913 = vld [vmem:[%s901 + $0x58] sm:$0xff]
  %v914 = vld [vmem:[%s901 + $0x60] sm:$0xff]
  %v915 = vld [vmem:[%s901 + $0x68] sm:$0xff]
  %v916 = vld [vmem:[%s901 + $0x70] sm:$0xff]
  %v917 = vld [vmem:[%s901 + $0x78] sm:$0xff]
  %v918 = vld [vmem:[%s901 + $0x80] sm:$0xff]
  %v919 = vld [vmem:[%s901 + $0x88] sm:$0xff]
  %v920 = vld [vmem:[%s901 + $0x90] sm:$0xff]
  %v921 = vld [vmem:[%s901 + $0x98] sm:$0xff]
  %v922 = vld [vmem:[%s901 + $0xa0] sm:$0xff]
  %v923 = vld [vmem:[%s901 + $0xa8] sm:$0xff]
  %v924 = vld [vmem:[%s901 + $0xb0] sm:$0xff]
  %v925 = vld [vmem:[%s901 + $0xb8] sm:$0xff]
  %v926 = vld [vmem:[%s901 + $0xc0] sm:$0xff]
  %v927 = vld [vmem:[%s901 + $0xc8] sm:$0xff]
  %v928 = vld [vmem:[%s901 + $0xd0] sm:$0xff]
  %v929 = vld [vmem:[%s901 + $0xd8] sm:$0xff]
  %v930 = vld [vmem:[%s901 + $0xe0] sm:$0xff]
  %v931 = vld [vmem:[%s901 + $0xe8] sm:$0xff]
  %v932 = vld [vmem:[%s901 + $0xf0] sm:$0xff]
  %v933 = vld [vmem:[%s901 + $0xf8] sm:$0xff]
  %934 = vmatprep.subr.mxu0 %v933
  %935 = vmatpush1.msra.mxu0 %v932
  %936 = vmatprep.subr.mxu0 %v931
  %937 = vmatpush1.msra.mxu0 %v930
  %938 = vmatprep.subr.mxu0 %v929
  %939 = vmatpush1.msra.mxu0 %v928
  %940 = vmatprep.subr.mxu0 %v927
  %941 = vmatpush1.msra.mxu0 %v926
  %942 = vmatprep.subr.mxu0 %v925
  %943 = vmatpush1.msra.mxu0 %v924
  %944 = vmatprep.subr.mxu0 %v923
  %945 = vmatpush1.msra.mxu0 %v922
  %946 = vmatprep.subr.mxu0 %v921
  %947 = vmatpush1.msra.mxu0 %v920
  %948 = vmatprep.subr.mxu0 %v919
  %949 = vmatpush1.msra.mxu0 %v918
  %950 = vmatprep.subr.mxu0 %v917
  %951 = vmatpush1.msra.mxu0 %v916
  %952 = vmatprep.subr.mxu0 %v915
  %953 = vmatpush1.msra.mxu0 %v914
  %954 = vmatprep.subr.mxu0 %v913
  %955 = vmatpush1.msra.mxu0 %v912
  %956 = vmatprep.subr.mxu0 %v911
  %957 = vmatpush1.msra.mxu0 %v910
  %958 = vmatprep.subr.mxu0 %v909
  %959 = vmatpush1.msra.mxu0 %v908
  %960 = vmatprep.subr.mxu0 %v907
  %961 = vmatpush1.msra.mxu0 %v906
  %962 = vmatprep.subr.mxu0 %v905
  %963 = vmatpush1.msra.mxu0 %v904
  %964 = vmatprep.subr.mxu0 %v903
  %965 = vmatpush1.msra.mxu0 %v902
  %966 = vmatprep.subr.mxu0 0.0
  %967 = vmatpush2.msra.mxu0 0.0
  %968 = vmatprep.subr.mxu0 0.0
  %969 = vmatpush2.msra.mxu0 0.0
  %970 = vmatprep.subr.mxu0 0.0
  %971 = vmatpush2.msra.mxu0 0.0
  %972 = vmatprep.subr.mxu0 0.0
  %973 = vmatpush2.msra.mxu0 0.0
  %974 = vmatprep.subr.mxu0 0.0
  %975 = vmatpush2.msra.mxu0 0.0
  %976 = vmatprep.subr.mxu0 0.0
  %977 = vmatpush2.msra.mxu0 0.0
  %978 = vmatprep.subr.mxu0 0.0
  %979 = vmatpush2.msra.mxu0 0.0
  %980 = vmatprep.subr.mxu0 0.0
  %981 = vmatpush2.msra.mxu0 0.0
  %982 = vmatprep.subr.mxu0 0.0
  %983 = vmatpush2.msra.mxu0 0.0
  %984 = vmatprep.subr.mxu0 0.0
  %985 = vmatpush2.msra.mxu0 0.0
  %986 = vmatprep.subr.mxu0 0.0
  %987 = vmatpush2.msra.mxu0 0.0
  %988 = vmatprep.subr.mxu0 0.0
  %989 = vmatpush2.msra.mxu0 0.0
  %990 = vmatprep.subr.mxu0 0.0
  %991 = vmatpush2.msra.mxu0 0.0
  %992 = vmatprep.subr.mxu0 0.0
  %993 = vmatpush2.msra.mxu0 0.0
  %994 = vmatprep.subr.mxu0 0.0
  %995 = vmatpush2.msra.mxu0 0.0
  %996 = vmatprep.subr.mxu0 0.0
  %997 = vmatpush2.msra.mxu0 0.0
  %998 = vmatprep.mubr.f32.mxu0 0.0
  %999 = vmatmul.mubr.f32.gmra.mxu0 %v900
  %v1000 = vpop.f32.mrf.mxu0
  %v1001 = vadd.f32 0.0, %v1000
  %v1002 = vpop.f32.mrf.mxu0
  %v1003 = vadd.f32 0.0, %v1002
  %1004 = vdwg.mxu0
  %v1005 = vadd.f32 %v896, %v1001
  %v1006 = vadd.f32 %v898, %v1003
  %v1007 = vld [vmem:[%s6] sm:$0x3]
  %v1009 = vlaneseq
  %v1010 = vshrl.u32 %v1009, 7
  %v1011 = vsub.s32 0, %v1010
  %v1012 = vrot.slane %v1007, %v1011
  %v1013 = vlaneseq
  %v1014 = vshrl.u32 %v1013, 7
  %v1015 = vsub.s32 1, %v1014
  %v1016 = vrot.slane %v1007, %v1015
  %v1019 = vadd.f32 %v1005, %v1012
  %v1020 = vadd.f32 %v1006, %v1016
  %v1021 = vmax.f32 %v1019, 0.0
  %v1022 = vmax.f32 %v1020, 0.0
  %v1023 = vld [vmem:[%s7] sm:$0xff]
  %v1024 = vld [vmem:[%s7 + $0x8] sm:$0xff]
  %v1025 = vld [vmem:[%s7 + $0x10] sm:$0xff]
  %v1026 = vld [vmem:[%s7 + $0x18] sm:$0xff]
  %v1027 = vld [vmem:[%s7 + $0x20] sm:$0xff]
  %v1028 = vld [vmem:[%s7 + $0x28] sm:$0xff]
  %v1029 = vld [vmem:[%s7 + $0x30] sm:$0xff]
  %v1030 = vld [vmem:[%s7 + $0x38] sm:$0xff]
  %v1031 = vld [vmem:[%s7 + $0x40] sm:$0xff]
  %v1032 = vld [vmem:[%s7 + $0x48] sm:$0xff]
  %v1033 = vld [vmem:[%s7 + $0x50] sm:$0xff]
  %v1034 = vld [vmem:[%s7 + $0x58] sm:$0xff]
  %v1035 = vld [vmem:[%s7 + $0x60] sm:$0xff]
  %v1036 = vld [vmem:[%s7 + $0x68] sm:$0xff]
  %v1037 = vld [vmem:[%s7 + $0x70] sm:$0xff]
  %v1038 = vld [vmem:[%s7 + $0x78] sm:$0xff]
  %v1039 = vld [vmem:[%s7 + $0x80] sm:$0xff]
  %v1040 = vld [vmem:[%s7 + $0x88] sm:$0xff]
  %v1041 = vld [vmem:[%s7 + $0x90] sm:$0xff]
  %v1042 = vld [vmem:[%s7 + $0x98] sm:$0xff]
  %v1043 = vld [vmem:[%s7 + $0xa0] sm:$0xff]
  %v1044 = vld [vmem:[%s7 + $0xa8] sm:$0xff]
  %v1045 = vld [vmem:[%s7 + $0xb0] sm:$0xff]
  %v1046 = vld [vmem:[%s7 + $0xb8] sm:$0xff]
  %v1047 = vld [vmem:[%s7 + $0xc0] sm:$0xff]
  %v1048 = vld [vmem:[%s7 + $0xc8] sm:$0xff]
  %v1049 = vld [vmem:[%s7 + $0xd0] sm:$0xff]
  %v1050 = vld [vmem:[%s7 + $0xd8] sm:$0xff]
  %v1051 = vld [vmem:[%s7 + $0xe0] sm:$0xff]
  %v1052 = vld [vmem:[%s7 + $0xe8] sm:$0xff]
  %v1053 = vld [vmem:[%s7 + $0xf0] sm:$0xff]
  %v1054 = vld [vmem:[%s7 + $0xf8] sm:$0xff]
  %v1055 = vld [vmem:[%s8] sm:$0x1]
  %v1057 = vlaneseq
  %v1058 = vshrl.u32 %v1057, 7
  %v1059 = vsub.s32 0, %v1058
  %v1060 = vrot.slane %v1055, %v1059
  %1062 = vmatprep.subr.mxu0 0.0
  %1063 = vmatpush1.msra.mxu0 %v1038
  %1064 = vmatprep.subr.mxu0 0.0
  %1065 = vmatpush1.msra.mxu0 %v1037
  %1066 = vmatprep.subr.mxu0 0.0
  %1067 = vmatpush1.msra.mxu0 %v1036
  %1068 = vmatprep.subr.mxu0 0.0
  %1069 = vmatpush1.msra.mxu0 %v1035
  %1070 = vmatprep.subr.mxu0 0.0
  %1071 = vmatpush1.msra.mxu0 %v1034
  %1072 = vmatprep.subr.mxu0 0.0
  %1073 = vmatpush1.msra.mxu0 %v1033
  %1074 = vmatprep.subr.mxu0 0.0
  %1075 = vmatpush1.msra.mxu0 %v1032
  %1076 = vmatprep.subr.mxu0 0.0
  %1077 = vmatpush1.msra.mxu0 %v1031
  %1078 = vmatprep.subr.mxu0 0.0
  %1079 = vmatpush1.msra.mxu0 %v1030
  %1080 = vmatprep.subr.mxu0 0.0
  %1081 = vmatpush1.msra.mxu0 %v1029
  %1082 = vmatprep.subr.mxu0 0.0
  %1083 = vmatpush1.msra.mxu0 %v1028
  %1084 = vmatprep.subr.mxu0 0.0
  %1085 = vmatpush1.msra.mxu0 %v1027
  %1086 = vmatprep.subr.mxu0 0.0
  %1087 = vmatpush1.msra.mxu0 %v1026
  %1088 = vmatprep.subr.mxu0 0.0
  %1089 = vmatpush1.msra.mxu0 %v1025
  %1090 = vmatprep.subr.mxu0 0.0
  %1091 = vmatpush1.msra.mxu0 %v1024
  %1092 = vmatprep.subr.mxu0 0.0
  %1093 = vmatpush1.msra.mxu0 %v1023
  %1094 = vmatprep.subr.mxu0 0.0
  %1095 = vmatpush2.msra.mxu0 %v1054
  %1096 = vmatprep.subr.mxu0 0.0
  %1097 = vmatpush2.msra.mxu0 %v1053
  %1098 = vmatprep.subr.mxu0 0.0
  %1099 = vmatpush2.msra.mxu0 %v1052
  %1100 = vmatprep.subr.mxu0 0.0
  %1101 = vmatpush2.msra.mxu0 %v1051
  %1102 = vmatprep.subr.mxu0 0.0
  %1103 = vmatpush2.msra.mxu0 %v1050
  %1104 = vmatprep.subr.mxu0 0.0
  %1105 = vmatpush2.msra.mxu0 %v1049
  %1106 = vmatprep.subr.mxu0 0.0
  %1107 = vmatpush2.msra.mxu0 %v1048
  %1108 = vmatprep.subr.mxu0 0.0
  %1109 = vmatpush2.msra.mxu0 %v1047
  %1110 = vmatprep.subr.mxu0 0.0
  %1111 = vmatpush2.msra.mxu0 %v1046
  %1112 = vmatprep.subr.mxu0 0.0
  %1113 = vmatpush2.msra.mxu0 %v1045
  %1114 = vmatprep.subr.mxu0 0.0
  %1115 = vmatpush2.msra.mxu0 %v1044
  %1116 = vmatprep.subr.mxu0 0.0
  %1117 = vmatpush2.msra.mxu0 %v1043
  %1118 = vmatprep.subr.mxu0 0.0
  %1119 = vmatpush2.msra.mxu0 %v1042
  %1120 = vmatprep.subr.mxu0 0.0
  %1121 = vmatpush2.msra.mxu0 %v1041
  %1122 = vmatprep.subr.mxu0 0.0
  %1123 = vmatpush2.msra.mxu0 %v1040
  %1124 = vmatprep.subr.mxu0 0.0
  %1125 = vmatpush2.msra.mxu0 %v1039
  %1126 = vmatprep.mubr.f32.mxu0 %v1022
  %1127 = vmatmul.mubr.f32.gmra.mxu0 %v1021
  %v1128 = vpop.f32.mrf.mxu0
  %v1129 = vadd.f32 %v1060, %v1128
  %v1130 = vpop.f32.mrf.mxu0
  %1131 = vdwg.mxu0
  %v1132 = vsub.f32 0.0, %v1129
  %v1133 = vmul.f32 %v1132, 1.442695
  %v1134 = vpow.pop %v1133
  %v1135 = vadd.f32 %v1134, 1.0
  %v1136 = vrcp.pop %v1135
  %v1137 = vmul.f32 1.0, %v1136
  %v1138 = vlaneseq
  %v1139 = vand.u32 %v1138, 127
  %vm1140 = vcmp.lt.s32.totalorder %v1139, 12
  %v1141 = vsel %vm1140, %v1137, %v1129
  %1142 = vst [vmem:[%s9] sm:$0xff] %v1141
  // Predicated region
  $region38: #{manager_forward.1} parent=0 // pred_check
    _
  $region39: #{manager_forward.1} parent=0 // pred_check_branch
    %1144 = sbr.rel (0) target = $region41
  $region40: #{manager_forward.1} parent=0 // pred_region
    _
  $region41: #{manager_forward.1} parent=0 // pred_fallthru
    _
  // Predicated region
  $region42: #{manager_forward.1} parent=0 // pred_check
    _
  $region43: #{manager_forward.1} parent=0 // pred_check_branch
    %1146 = sbr.rel (0) target = $region45
  $region44: #{manager_forward.1} parent=0 // pred_region
    _
  $region45: #{manager_forward.1} parent=0 // pred_fallthru
    _

</llo_original>
